<compile_context>
chip_gen: v7x
topology: tpu7x:2x2x1
jax: 0.10.0
libtpu: 0.0.40
codegen_flags: <defaults>
</compile_context>

<pallas_src>
import functools

import jax
import jax.numpy as jnp
from jax import lax
from jax.experimental import pallas as pl
from jax.experimental.pallas import tpu as pltpu


def _tcn_stage_kernel(x_ref, wci_ref, b_ref, wl_ref, out_ref, h_scratch,
                      *, dilations, seq_len):
    """One full SingleStageTCN forward for a tile of whole sequences.

    x_ref    : (B_tile*T, C_pad)  flat batch*time rows, channels on lanes
    wci_ref  : (C_pad, F)         conv_in weight, pre-transposed (zero-padded rows)
    b_ref    : (2L+4, F)          rows: [b_ci | b_dil(0..L-1) | b_pw(0..L-1) | b_co |
                                          w_lin (as a row) | b_lin (lane 0)]
    wl_ref   : (L+1, 4F, F)       per-layer slab: rows 0:3F fused dilated taps for
                                  (x[t-d], x[t], x[t+d]), rows 3F:4F pointwise 1x1;
                                  slab L holds conv_out in rows 0:F (rest zero)
    out_ref  : (B_tile, 1)
    h_scratch: (B_tile*T, F)      VMEM scratch for the strided last-step gather
    """
    T = seq_len
    L = len(dilations)
    BT = x_ref.shape[0]            # B_tile * T
    Bt = out_ref.shape[0]          # B_tile
    F = wci_ref.shape[1]

    # conv_in: 1x1 conv == per-timestep matmul over channels (padded rows contribute 0).
    h = (jnp.dot(x_ref[...], wci_ref[...], preferred_element_type=jnp.float32)
         + b_ref[0:1, :])

    # Per-row position inside its sequence; gates the zero-padding of the dilated conv
    # and the sequence boundaries of the batch-folded layout.
    tpos = lax.broadcasted_iota(jnp.int32, (BT, 1), 0) % T

    # TODO(synk): for deep stages (MS-TCN commonly L=10) switch to lax.fori_loop over
    # layers to bound vreg live ranges; with L=3 static unrolling is fine.
    for l, d in enumerate(dilations):
        wl = wl_ref[l]                         # (4F, F) this layer's weight slab
        w_taps = wl[:3 * F]                    # (3F, F) fused dilated-conv taps
        w_pw = wl[3 * F:]                      # (F, F)  per-layer 1x1 conv
        # h[t-d] / h[t+d] via XLU rolls; mask rows whose source falls outside the
        # sequence (also handles wrap-around across sequences in the folded slab).
        hm = jnp.where(tpos >= d, pltpu.roll(h, shift=d, axis=0), 0.0)
        hp = jnp.where(tpos < T - d, pltpu.roll(h, shift=BT - d, axis=0), 0.0)
        hcat = jnp.concatenate([hm, h, hp], axis=1)            # (BT, 3F): K=96 matmul
        y = (jnp.dot(hcat, w_taps, preferred_element_type=jnp.float32)
             + b_ref[1 + l:2 + l, :])
        y = jnp.maximum(y, 0.0)                                 # ReLU
        h = (jnp.dot(y, w_pw, preferred_element_type=jnp.float32)
             + b_ref[1 + L + l:2 + L + l, :])
        # TODO(synk): nn.Dropout is identity in eval mode; train-mode masking omitted.

    # Gather the LAST time step of each sequence BEFORE conv_out / linear (strided
    # sublane read of rows T-1, 2T-1, ...), so the tail only works on (Bt, F).
    h_scratch[...] = h
    last = h_scratch[pl.ds(T - 1, Bt, stride=T), :]             # (Bt, F)

    w_co = wl_ref[L][:F]                                        # (F, F) conv_out
    g = (jnp.dot(last, w_co, preferred_element_type=jnp.float32)
         + b_ref[1 + 2 * L:2 + 2 * L, :])                       # (Bt, F)

    # Final Linear(F -> 1): lane-broadcast multiply + cross-lane reduce (cheaper than a
    # K=F, N=1 MXU pass at this size).
    w_lin = b_ref[2 + 2 * L:3 + 2 * L, :]                       # (1, F)
    b_lin = b_ref[3 + 2 * L:4 + 2 * L, 0:1]                     # (1, 1)
    out = jnp.sum(g * w_lin, axis=1, keepdims=True) + b_lin     # (Bt, 1)
    out_ref[...] = out.astype(out_ref.dtype)


def pack_stage_params(params):
    """One-time repack of PyTorch-layout weights into the kernel's lane-dense slabs.

    Called once at init (not per forward) so the transpose/stack cost is amortized.
    """
    F, C = params["w_ci"].shape[0], params["w_ci"].shape[1]
    L = len(params["w_dil"])
    C_pad = ((C + 7) // 8) * 8      # pad conv_in contraction dim to a sublane group

    wci_t = jnp.zeros((C_pad, F), jnp.float32).at[:C, :].set(params["w_ci"][:, :, 0].T)

    layer_slabs = []
    for l in range(L):
        w = params["w_dil"][l]                                   # (F, F, 3)
        taps = jnp.concatenate([w[:, :, 0].T, w[:, :, 1].T, w[:, :, 2].T], axis=0)
        wp = params["w_pw"][l][:, :, 0].T                        # (F, F)
        layer_slabs.append(jnp.concatenate([taps, wp], axis=0))  # (4F, F)
    wco_slab = jnp.concatenate(
        [params["w_co"][:, :, 0].T, jnp.zeros((3 * F, F), jnp.float32)], axis=0)
    layer_slabs.append(wco_slab)
    w_layers = jnp.stack(layer_slabs)                            # (L+1, 4F, F)

    b_rows = [params["b_ci"].reshape(1, F)]
    b_rows += [params["b_dil"][l].reshape(1, F) for l in range(L)]
    b_rows += [params["b_pw"][l].reshape(1, F) for l in range(L)]
    b_rows.append(params["b_co"].reshape(1, F))
    b_rows.append(params["w_lin"].reshape(1, F))                 # linear weight as a row
    b_rows.append(jnp.zeros((1, F), jnp.float32).at[0, 0].set(params["b_lin"][0]))
    b_slab = jnp.concatenate(b_rows, axis=0)                     # (2L+4, F)

    return {"wci": wci_t, "b": b_slab, "w_layers": w_layers,
            "C": C, "C_pad": C_pad, "F": F, "L": L}


def tcn_stage_forward(x, packed, *, dilations, b_tile=None):
    """SingleStageTCN forward. x: (B, T, C) float32 -> (B, 1)."""
    B, T, C = x.shape
    F, L, C_pad = packed["F"], packed["L"], packed["C_pad"]
    assert packed["C"] == C and L == len(dilations)

    if b_tile is None:
        # Split the batch across >= 2 grid steps (one per v7x TensorCore) only when the
        # per-step work amortizes the ~0.35 us step overhead and the tile stays
        # (8,128)-aligned; the toy demo keeps the whole batch in one grid step.
        b_tile = B // 2 if (B % 16 == 0 and B * T >= 4096) else B
    assert B % b_tile == 0

    # TODO(synk): for large B*T on v6e/v7x, cast x / w_layers to bfloat16 here (keep
    # preferred_element_type=f32 in the kernel); not worth it at demo size / on v5e.
    x2d = x.reshape(B * T, C)
    if C_pad != C:
        x2d = jnp.pad(x2d, ((0, 0), (0, C_pad - C)))

    kernel = functools.partial(_tcn_stage_kernel,
                               dilations=tuple(dilations), seq_len=T)

    return pl.pallas_call(
        kernel,
        out_shape=jax.ShapeDtypeStruct((B, 1), x.dtype),
        grid_spec=pltpu.PrefetchScalarGridSpec(
            num_scalar_prefetch=0,
            grid=(B // b_tile,),
            in_specs=[
                pl.BlockSpec((b_tile * T, C_pad), lambda i: (i, 0)),    # x slab
                pl.BlockSpec((C_pad, F), lambda i: (0, 0)),             # conv_in W^T
                pl.BlockSpec((2 * L + 4, F), lambda i: (0, 0)),         # bias/linear slab
                pl.BlockSpec((L + 1, 4 * F, F), lambda i: (0, 0, 0)),   # layer weights
            ],
            out_specs=pl.BlockSpec((b_tile, 1), lambda i: (i, 0)),
            scratch_shapes=[pltpu.VMEM((b_tile * T, F), jnp.float32)],
        ),
        compiler_params=pltpu.CompilerParams(
            dimension_semantics=("parallel",),
            vmem_limit_bytes=32 * 1024 * 1024),
    )(x2d, packed["wci"], packed["b"], packed["w_layers"])


def multi_stage_forward(x, packed_stages, *, dilations):
    """MultiStageModel.forward (returns the last stage's output, shape (B, 1))."""
    out = tcn_stage_forward(x, packed_stages[0], dilations=dilations)
    # TODO(synk): for num_stages > 1 the reference forward calls x.transpose(1, 2) on
    # the 2-D (B, 1) tensor F.softmax(out), which raises in PyTorch; only the runnable
    # num_stages == 1 configuration is implemented here.
    return out


# ----------------------------- pure-JAX reference ------------------------------------

def reference_stage(x, params, *, dilations):
    """Mirror of SingleStageTCN.forward (eval mode) in plain JAX."""
    B, T, C = x.shape
    hp = jax.lax.Precision.HIGHEST
    h = jnp.einsum('btc,fc->btf', x, params["w_ci"][:, :, 0], precision=hp) + params["b_ci"]
    for l, d in enumerate(dilations):
        wd, bd = params["w_dil"][l], params["b_dil"][l]
        wp_, bp_ = params["w_pw"][l], params["b_pw"][l]
        hm = jnp.pad(h, ((0, 0), (d, 0), (0, 0)))[:, :T, :]    # h[t - d] (zero pad)
        hpj = jnp.pad(h, ((0, 0), (0, d), (0, 0)))[:, d:, :]   # h[t + d] (zero pad)
        y = (jnp.einsum('btf,gf->btg', hm, wd[:, :, 0], precision=hp)
             + jnp.einsum('btf,gf->btg', h, wd[:, :, 1], precision=hp)
             + jnp.einsum('btf,gf->btg', hpj, wd[:, :, 2], precision=hp)
             + bd)
        y = jax.nn.relu(y)
        h = jnp.einsum('btf,gf->btg', y, wp_[:, :, 0], precision=hp) + bp_
    h = jnp.einsum('btf,gf->btg', h, params["w_co"][:, :, 0], precision=hp) + params["b_co"]
    last = h[:, -1, :]
    return jnp.einsum('bf,of->bo', last, params["w_lin"], precision=hp) + params["b_lin"]


def init_stage_params(key, n_channel, n_features, n_layers):
    ks = list(jax.random.split(key, 6 + 4 * n_layers))

    def nrm(shape, scale):
        return jax.random.normal(ks.pop(), shape, dtype=jnp.float32) * scale

    F, C = n_features, n_channel
    return {
        "w_ci": nrm((F, C, 1), 0.3),
        "b_ci": nrm((F,), 0.1),
        "w_dil": [nrm((F, F, 3), 0.10) for _ in range(n_layers)],
        "b_dil": [nrm((F,), 0.1) for _ in range(n_layers)],
        "w_pw": [nrm((F, F, 1), 0.15) for _ in range(n_layers)],
        "b_pw": [nrm((F,), 0.1) for _ in range(n_layers)],
        "w_co": nrm((F, F, 1), 0.15),
        "b_co": nrm((F,), 0.1),
        "w_lin": nrm((1, F), 0.2),
        "b_lin": nrm((1,), 0.1),
    }


if __name__ == "__main__":
    # MultiStageModel(num_stages=1, n_channel=4, n_features=32, n_layers=3)
    num_stages = 1
    n_channel = 4
    n_features = 32
    n_layers = 3
    batch = 2
    seq_len = 16
    dilations = tuple(2 ** i for i in range(n_layers))

    key = jax.random.PRNGKey(0)
    kx, kp = jax.random.split(key)
    x = jax.random.normal(kx, (batch, seq_len, n_channel), dtype=jnp.float32)
    params = init_stage_params(kp, n_channel, n_features, n_layers)
    packed = pack_stage_params(params)     # weight repack cached at init, not per call

    out = multi_stage_forward(x, [packed], dilations=dilations)
    out = jax.block_until_ready(out)

    ref = reference_stage(x, params, dilations=dilations)
    assert out.shape == (batch, 1)
    assert jnp.allclose(out, ref, atol=1e-3, rtol=1e-3), (
        f"mismatch vs reference: max abs diff {float(jnp.max(jnp.abs(out - ref)))}")

    print("KERNEL_OK")
</pallas_src>

<mosaic_0001>
module attributes {stable_mosaic.version = 11 : i64} {
  func.func @_tcn_stage_kernel(%arg0: i32, %arg1: memref<32x8xf32, #tpu.memory_space<vmem>>, %arg2: memref<8x32xf32, #tpu.memory_space<vmem>>, %arg3: memref<10x32xf32, #tpu.memory_space<vmem>>, %arg4: memref<4x128x32xf32, #tpu.memory_space<vmem>>, %arg5: memref<2x1xf32, #tpu.memory_space<vmem>>, %arg6: memref<32x32xf32, #tpu.memory_space<vmem>>) attributes {dimension_semantics = [#tpu.dimension_semantics<parallel>], iteration_bounds = array<i64: 1>, scalar_prefetch = 0 : i64, scratch_operands = 1 : i64, tpu.core_type = #tpu.core_type<tc>, window_params = [{transform_indices = @transform_0, window_bounds = array<i64: 32, 8>}, {pipeline_mode = #tpu.pipeline_mode<synchronous>, transform_indices = @transform_1, window_bounds = array<i64: 8, 32>}, {pipeline_mode = #tpu.pipeline_mode<synchronous>, transform_indices = @transform_2, window_bounds = array<i64: 10, 32>}, {pipeline_mode = #tpu.pipeline_mode<synchronous>, transform_indices = @transform_3, window_bounds = array<i64: 4, 128, 32>}, {transform_indices = @transform_4, window_bounds = array<i64: 2, 1>}]} {
    %c0 = arith.constant 0 : index
    %c0_0 = arith.constant 0 : index
    %0 = vector.load %arg1[%c0, %c0_0] : memref<32x8xf32, #tpu.memory_space<vmem>>, vector<32x8xf32>
    %c0_1 = arith.constant 0 : index
    %c0_2 = arith.constant 0 : index
    %1 = vector.load %arg2[%c0_1, %c0_2] : memref<8x32xf32, #tpu.memory_space<vmem>>, vector<8x32xf32>
    %cst = arith.constant dense<0.000000e+00> : vector<32x32xf32>
    %2 = tpu.matmul %0, %1, %cst {dimension_numbers = #tpu.dot_dimension_numbers<[1], [0], [0], [1], [0, 0, 1, 1], [], []>} : vector<32x8xf32>, vector<8x32xf32>, vector<32x32xf32> -> vector<32x32xf32>
    %c0_3 = arith.constant 0 : index
    %c0_4 = arith.constant 0 : index
    %3 = vector.load %arg3[%c0_3, %c0_4] : memref<10x32xf32, #tpu.memory_space<vmem>>, vector<1x32xf32>
    %4 = vector.broadcast %3 : vector<1x32xf32> to vector<32x32xf32>
    %5 = arith.addf %2, %4 : vector<32x32xf32>
    %6 = tpu.iota {dimensions = array<i32: 0>} : vector<32x1xi32>
    %c16_i32 = arith.constant 16 : i32
    %c0_i32 = arith.constant 0 : i32
    %7 = arith.cmpi eq, %c16_i32, %c0_i32 : i32
    %c1_i32 = arith.constant 1 : i32
    %8 = arith.select %7, %c1_i32, %c16_i32 : i32
    %9 = vector.broadcast %8 : i32 to vector<32x1xi32>
    %10 = arith.remsi %6, %9 : vector<32x1xi32>
    %c0_i32_5 = arith.constant 0 : i32
    %11 = vector.broadcast %c0_i32_5 : i32 to vector<32x1xi32>
    %12 = arith.cmpi ne, %10, %11 : vector<32x1xi32>
    %c0_i32_6 = arith.constant 0 : i32
    %13 = vector.broadcast %c0_i32_6 : i32 to vector<32x1xi32>
    %14 = arith.cmpi slt, %10, %13 : vector<32x1xi32>
    %c0_i32_7 = arith.constant 0 : i32
    %15 = arith.cmpi slt, %8, %c0_i32_7 : i32
    %16 = vector.broadcast %15 : i1 to vector<32x1xi1>
    %17 = vector.broadcast %16 : vector<32x1xi1> to vector<32x1xi1>
    %18 = arith.xori %14, %17 : vector<32x1xi1>
    %19 = arith.andi %18, %12 : vector<32x1xi1>
    %20 = vector.broadcast %8 : i32 to vector<32x1xi32>
    %21 = arith.addi %10, %20 : vector<32x1xi32>
    %22 = arith.select %19, %21, %10 : vector<32x1xi1>, vector<32x1xi32>
    %c0_8 = arith.constant 0 : index
    %c0_9 = arith.constant 0 : index
    %c0_10 = arith.constant 0 : index
    %23 = vector.load %arg4[%c0_8, %c0_9, %c0_10] : memref<4x128x32xf32, #tpu.memory_space<vmem>>, vector<1x128x32xf32>
    %24 = vector.shape_cast %23 : vector<1x128x32xf32> to vector<128x32xf32>
    %25 = vector.extract_strided_slice %24 {offsets = [0, 0], sizes = [96, 32], strides = [1, 1]} : vector<128x32xf32> to vector<96x32xf32>
    %26 = vector.extract_strided_slice %24 {offsets = [96, 0], sizes = [32, 32], strides = [1, 1]} : vector<128x32xf32> to vector<32x32xf32>
    %c1_i32_11 = arith.constant 1 : i32
    %27 = vector.broadcast %c1_i32_11 : i32 to vector<32x1xi32>
    %28 = arith.cmpi sge, %22, %27 : vector<32x1xi32>
    %c1_i32_12 = arith.constant 1 : i32
    %29 = tpu.dynamic_rotate %5 by %c1_i32_12 dim 0 : vector<32x32xf32>, i32 -> vector<32x32xf32>
    %cst_13 = arith.constant 0.000000e+00 : f32
    %30 = vector.shape_cast %28 : vector<32x1xi1> to vector<32x1xi1>
    %31 = vector.broadcast %30 : vector<32x1xi1> to vector<32x32xi1>
    %32 = vector.broadcast %cst_13 : f32 to vector<32x32xf32>
    %33 = arith.select %31, %29, %32 : vector<32x32xi1>, vector<32x32xf32>
    %c15_i32 = arith.constant 15 : i32
    %34 = vector.broadcast %c15_i32 : i32 to vector<32x1xi32>
    %35 = arith.cmpi slt, %22, %34 : vector<32x1xi32>
    %c31_i32 = arith.constant 31 : i32
    %36 = tpu.dynamic_rotate %5 by %c31_i32 dim 0 : vector<32x32xf32>, i32 -> vector<32x32xf32>
    %cst_14 = arith.constant 0.000000e+00 : f32
    %37 = vector.shape_cast %35 : vector<32x1xi1> to vector<32x1xi1>
    %38 = vector.broadcast %37 : vector<32x1xi1> to vector<32x32xi1>
    %39 = vector.broadcast %cst_14 : f32 to vector<32x32xf32>
    %40 = arith.select %38, %36, %39 : vector<32x32xi1>, vector<32x32xf32>
    %41 = tpu.concatenate %33, %5, %40 in 1 : vector<32x32xf32>, vector<32x32xf32>, vector<32x32xf32> -> vector<32x96xf32>
    %cst_15 = arith.constant dense<0.000000e+00> : vector<32x32xf32>
    %42 = tpu.matmul %41, %25, %cst_15 {dimension_numbers = #tpu.dot_dimension_numbers<[1], [0], [0], [1], [0, 0, 1, 1], [], []>} : vector<32x96xf32>, vector<96x32xf32>, vector<32x32xf32> -> vector<32x32xf32>
    %c1 = arith.constant 1 : index
    %c0_16 = arith.constant 0 : index
    %43 = vector.load %arg3[%c1, %c0_16] : memref<10x32xf32, #tpu.memory_space<vmem>>, vector<1x32xf32>
    %44 = vector.broadcast %43 : vector<1x32xf32> to vector<32x32xf32>
    %45 = arith.addf %42, %44 : vector<32x32xf32>
    %cst_17 = arith.constant 0.000000e+00 : f32
    %46 = vector.broadcast %cst_17 : f32 to vector<32x32xf32>
    %47 = arith.maximumf %45, %46 : vector<32x32xf32>
    %cst_18 = arith.constant dense<0.000000e+00> : vector<32x32xf32>
    %48 = tpu.matmul %47, %26, %cst_18 {dimension_numbers = #tpu.dot_dimension_numbers<[1], [0], [0], [1], [0, 0, 1, 1], [], []>} : vector<32x32xf32>, vector<32x32xf32>, vector<32x32xf32> -> vector<32x32xf32>
    %c4 = arith.constant 4 : index
    %c0_19 = arith.constant 0 : index
    %49 = vector.load %arg3[%c4, %c0_19] : memref<10x32xf32, #tpu.memory_space<vmem>>, vector<1x32xf32>
    %50 = vector.broadcast %49 : vector<1x32xf32> to vector<32x32xf32>
    %51 = arith.addf %48, %50 : vector<32x32xf32>
    %c1_20 = arith.constant 1 : index
    %c0_21 = arith.constant 0 : index
    %c0_22 = arith.constant 0 : index
    %52 = vector.load %arg4[%c1_20, %c0_21, %c0_22] : memref<4x128x32xf32, #tpu.memory_space<vmem>>, vector<1x128x32xf32>
    %53 = vector.shape_cast %52 : vector<1x128x32xf32> to vector<128x32xf32>
    %54 = vector.extract_strided_slice %53 {offsets = [0, 0], sizes = [96, 32], strides = [1, 1]} : vector<128x32xf32> to vector<96x32xf32>
    %55 = vector.extract_strided_slice %53 {offsets = [96, 0], sizes = [32, 32], strides = [1, 1]} : vector<128x32xf32> to vector<32x32xf32>
    %c2_i32 = arith.constant 2 : i32
    %56 = vector.broadcast %c2_i32 : i32 to vector<32x1xi32>
    %57 = arith.cmpi sge, %22, %56 : vector<32x1xi32>
    %c2_i32_23 = arith.constant 2 : i32
    %58 = tpu.dynamic_rotate %51 by %c2_i32_23 dim 0 : vector<32x32xf32>, i32 -> vector<32x32xf32>
    %cst_24 = arith.constant 0.000000e+00 : f32
    %59 = vector.shape_cast %57 : vector<32x1xi1> to vector<32x1xi1>
    %60 = vector.broadcast %59 : vector<32x1xi1> to vector<32x32xi1>
    %61 = vector.broadcast %cst_24 : f32 to vector<32x32xf32>
    %62 = arith.select %60, %58, %61 : vector<32x32xi1>, vector<32x32xf32>
    %c14_i32 = arith.constant 14 : i32
    %63 = vector.broadcast %c14_i32 : i32 to vector<32x1xi32>
    %64 = arith.cmpi slt, %22, %63 : vector<32x1xi32>
    %c30_i32 = arith.constant 30 : i32
    %65 = tpu.dynamic_rotate %51 by %c30_i32 dim 0 : vector<32x32xf32>, i32 -> vector<32x32xf32>
    %cst_25 = arith.constant 0.000000e+00 : f32
    %66 = vector.shape_cast %64 : vector<32x1xi1> to vector<32x1xi1>
    %67 = vector.broadcast %66 : vector<32x1xi1> to vector<32x32xi1>
    %68 = vector.broadcast %cst_25 : f32 to vector<32x32xf32>
    %69 = arith.select %67, %65, %68 : vector<32x32xi1>, vector<32x32xf32>
    %70 = tpu.concatenate %62, %51, %69 in 1 : vector<32x32xf32>, vector<32x32xf32>, vector<32x32xf32> -> vector<32x96xf32>
    %cst_26 = arith.constant dense<0.000000e+00> : vector<32x32xf32>
    %71 = tpu.matmul %70, %54, %cst_26 {dimension_numbers = #tpu.dot_dimension_numbers<[1], [0], [0], [1], [0, 0, 1, 1], [], []>} : vector<32x96xf32>, vector<96x32xf32>, vector<32x32xf32> -> vector<32x32xf32>
    %c2 = arith.constant 2 : index
    %c0_27 = arith.constant 0 : index
    %72 = vector.load %arg3[%c2, %c0_27] : memref<10x32xf32, #tpu.memory_space<vmem>>, vector<1x32xf32>
    %73 = vector.broadcast %72 : vector<1x32xf32> to vector<32x32xf32>
    %74 = arith.addf %71, %73 : vector<32x32xf32>
    %cst_28 = arith.constant 0.000000e+00 : f32
    %75 = vector.broadcast %cst_28 : f32 to vector<32x32xf32>
    %76 = arith.maximumf %74, %75 : vector<32x32xf32>
    %cst_29 = arith.constant dense<0.000000e+00> : vector<32x32xf32>
    %77 = tpu.matmul %76, %55, %cst_29 {dimension_numbers = #tpu.dot_dimension_numbers<[1], [0], [0], [1], [0, 0, 1, 1], [], []>} : vector<32x32xf32>, vector<32x32xf32>, vector<32x32xf32> -> vector<32x32xf32>
    %c5 = arith.constant 5 : index
    %c0_30 = arith.constant 0 : index
    %78 = vector.load %arg3[%c5, %c0_30] : memref<10x32xf32, #tpu.memory_space<vmem>>, vector<1x32xf32>
    %79 = vector.broadcast %78 : vector<1x32xf32> to vector<32x32xf32>
    %80 = arith.addf %77, %79 : vector<32x32xf32>
    %c2_31 = arith.constant 2 : index
    %c0_32 = arith.constant 0 : index
    %c0_33 = arith.constant 0 : index
    %81 = vector.load %arg4[%c2_31, %c0_32, %c0_33] : memref<4x128x32xf32, #tpu.memory_space<vmem>>, vector<1x128x32xf32>
    %82 = vector.shape_cast %81 : vector<1x128x32xf32> to vector<128x32xf32>
    %83 = vector.extract_strided_slice %82 {offsets = [0, 0], sizes = [96, 32], strides = [1, 1]} : vector<128x32xf32> to vector<96x32xf32>
    %84 = vector.extract_strided_slice %82 {offsets = [96, 0], sizes = [32, 32], strides = [1, 1]} : vector<128x32xf32> to vector<32x32xf32>
    %c4_i32 = arith.constant 4 : i32
    %85 = vector.broadcast %c4_i32 : i32 to vector<32x1xi32>
    %86 = arith.cmpi sge, %22, %85 : vector<32x1xi32>
    %c4_i32_34 = arith.constant 4 : i32
    %87 = tpu.dynamic_rotate %80 by %c4_i32_34 dim 0 : vector<32x32xf32>, i32 -> vector<32x32xf32>
    %cst_35 = arith.constant 0.000000e+00 : f32
    %88 = vector.shape_cast %86 : vector<32x1xi1> to vector<32x1xi1>
    %89 = vector.broadcast %88 : vector<32x1xi1> to vector<32x32xi1>
    %90 = vector.broadcast %cst_35 : f32 to vector<32x32xf32>
    %91 = arith.select %89, %87, %90 : vector<32x32xi1>, vector<32x32xf32>
    %c12_i32 = arith.constant 12 : i32
    %92 = vector.broadcast %c12_i32 : i32 to vector<32x1xi32>
    %93 = arith.cmpi slt, %22, %92 : vector<32x1xi32>
    %c28_i32 = arith.constant 28 : i32
    %94 = tpu.dynamic_rotate %80 by %c28_i32 dim 0 : vector<32x32xf32>, i32 -> vector<32x32xf32>
    %cst_36 = arith.constant 0.000000e+00 : f32
    %95 = vector.shape_cast %93 : vector<32x1xi1> to vector<32x1xi1>
    %96 = vector.broadcast %95 : vector<32x1xi1> to vector<32x32xi1>
    %97 = vector.broadcast %cst_36 : f32 to vector<32x32xf32>
    %98 = arith.select %96, %94, %97 : vector<32x32xi1>, vector<32x32xf32>
    %99 = tpu.concatenate %91, %80, %98 in 1 : vector<32x32xf32>, vector<32x32xf32>, vector<32x32xf32> -> vector<32x96xf32>
    %cst_37 = arith.constant dense<0.000000e+00> : vector<32x32xf32>
    %100 = tpu.matmul %99, %83, %cst_37 {dimension_numbers = #tpu.dot_dimension_numbers<[1], [0], [0], [1], [0, 0, 1, 1], [], []>} : vector<32x96xf32>, vector<96x32xf32>, vector<32x32xf32> -> vector<32x32xf32>
    %c3 = arith.constant 3 : index
    %c0_38 = arith.constant 0 : index
    %101 = vector.load %arg3[%c3, %c0_38] : memref<10x32xf32, #tpu.memory_space<vmem>>, vector<1x32xf32>
    %102 = vector.broadcast %101 : vector<1x32xf32> to vector<32x32xf32>
    %103 = arith.addf %100, %102 : vector<32x32xf32>
    %cst_39 = arith.constant 0.000000e+00 : f32
    %104 = vector.broadcast %cst_39 : f32 to vector<32x32xf32>
    %105 = arith.maximumf %103, %104 : vector<32x32xf32>
    %cst_40 = arith.constant dense<0.000000e+00> : vector<32x32xf32>
    %106 = tpu.matmul %105, %84, %cst_40 {dimension_numbers = #tpu.dot_dimension_numbers<[1], [0], [0], [1], [0, 0, 1, 1], [], []>} : vector<32x32xf32>, vector<32x32xf32>, vector<32x32xf32> -> vector<32x32xf32>
    %c6 = arith.constant 6 : index
    %c0_41 = arith.constant 0 : index
    %107 = vector.load %arg3[%c6, %c0_41] : memref<10x32xf32, #tpu.memory_space<vmem>>, vector<1x32xf32>
    %108 = vector.broadcast %107 : vector<1x32xf32> to vector<32x32xf32>
    %109 = arith.addf %106, %108 : vector<32x32xf32>
    %c0_42 = arith.constant 0 : index
    %c0_43 = arith.constant 0 : index
    %110 = vector.load %arg6[%c0_42, %c0_43] : memref<32x32xf32, #tpu.memory_space<vmem>>, vector<32x32xf32>
    tpu.vector_store %arg6[%c0_42, %c0_43], %109 {strides = array<i32>} : memref<32x32xf32, #tpu.memory_space<vmem>>, vector<32x32xf32>,
    %c15 = arith.constant 15 : index
    %c0_44 = arith.constant 0 : index
    %111 = tpu.strided_load %arg6[%c15, %c0_44] {strides = array<i32: 16, 1>} : memref<32x32xf32, #tpu.memory_space<vmem>>, vector<2x32xf32>
    %c3_45 = arith.constant 3 : index
    %c0_46 = arith.constant 0 : index
    %c0_47 = arith.constant 0 : index
    %112 = vector.load %arg4[%c3_45, %c0_46, %c0_47] : memref<4x128x32xf32, #tpu.memory_space<vmem>>, vector<1x128x32xf32>
    %113 = vector.shape_cast %112 : vector<1x128x32xf32> to vector<128x32xf32>
    %114 = vector.extract_strided_slice %113 {offsets = [0, 0], sizes = [32, 32], strides = [1, 1]} : vector<128x32xf32> to vector<32x32xf32>
    %cst_48 = arith.constant dense<0.000000e+00> : vector<2x32xf32>
    %115 = tpu.matmul %111, %114, %cst_48 {dimension_numbers = #tpu.dot_dimension_numbers<[1], [0], [0], [1], [0, 0, 1, 1], [], []>} : vector<2x32xf32>, vector<32x32xf32>, vector<2x32xf32> -> vector<2x32xf32>
    %c7 = arith.constant 7 : index
    %c0_49 = arith.constant 0 : index
    %116 = vector.load %arg3[%c7, %c0_49] : memref<10x32xf32, #tpu.memory_space<vmem>>, vector<1x32xf32>
    %117 = vector.broadcast %116 : vector<1x32xf32> to vector<2x32xf32>
    %118 = arith.addf %115, %117 : vector<2x32xf32>
    %c8 = arith.constant 8 : index
    %c0_50 = arith.constant 0 : index
    %119 = vector.load %arg3[%c8, %c0_50] : memref<10x32xf32, #tpu.memory_space<vmem>>, vector<1x32xf32>
    %c9 = arith.constant 9 : index
    %c0_51 = arith.constant 0 : index
    %120 = vector.load %arg3[%c9, %c0_51] : memref<10x32xf32, #tpu.memory_space<vmem>>, vector<1x1xf32>
    %121 = vector.broadcast %119 : vector<1x32xf32> to vector<2x32xf32>
    %122 = arith.mulf %118, %121 : vector<2x32xf32>
    %cst_52 = arith.constant dense<0.000000e+00> : vector<2xf32>
    %123 = vector.multi_reduction <add>, %122, %cst_52 [1] : vector<2x32xf32> to vector<2xf32>
    %124 = vector.shape_cast %123 : vector<2xf32> to vector<2x1xf32>
    %125 = vector.broadcast %120 : vector<1x1xf32> to vector<2x1xf32>
    %126 = arith.addf %124, %125 : vector<2x1xf32>
    %c0_53 = arith.constant 0 : index
    %c0_54 = arith.constant 0 : index
    %127 = vector.load %arg5[%c0_53, %c0_54] : memref<2x1xf32, #tpu.memory_space<vmem>>, vector<2x1xf32>
    tpu.vector_store %arg5[%c0_53, %c0_54], %126 {strides = array<i32>} : memref<2x1xf32, #tpu.memory_space<vmem>>, vector<2x1xf32>,
    return
  }
  func.func @transform_0(%arg0: i32) -> (i32, i32) {
    %c0_i32 = arith.constant 0 : i32
    %c0_i32_0 = arith.constant 0 : i32
    return %arg0, %c0_i32 : i32, i32
  }
  func.func @transform_1(%arg0: i32) -> (i32, i32) {
    %c0_i32 = arith.constant 0 : i32
    %c0_i32_0 = arith.constant 0 : i32
    %c0_i32_1 = arith.constant 0 : i32
    return %c0_i32, %c0_i32_0 : i32, i32
  }
  func.func @transform_2(%arg0: i32) -> (i32, i32) {
    %c0_i32 = arith.constant 0 : i32
    %c0_i32_0 = arith.constant 0 : i32
    %c0_i32_1 = arith.constant 0 : i32
    return %c0_i32, %c0_i32_0 : i32, i32
  }
  func.func @transform_3(%arg0: i32) -> (i32, i32, i32) {
    %c0_i32 = arith.constant 0 : i32
    %c0_i32_0 = arith.constant 0 : i32
    %c0_i32_1 = arith.constant 0 : i32
    %c0_i32_2 = arith.constant 0 : i32
    return %c0_i32, %c0_i32_0, %c0_i32_1 : i32, i32, i32
  }
  func.func @transform_4(%arg0: i32) -> (i32, i32) {
    %c0_i32 = arith.constant 0 : i32
    %c0_i32_0 = arith.constant 0 : i32
    return %arg0, %c0_i32 : i32, i32
  }
}

</mosaic_0001>

<llo_original>
// kernel: tpu_custom_call.1
$region0: #{tpu_custom_call.1}
  #allocation0 [shape = 'u32[]', space=smem, size = 0x4, offset = 0x4, fixed_abs, tag = 'smem constant byte address 0x4 - core index']
  #allocation1 [shape = 'u32[144,128]{1,0:T(1,128)}', space=vmem, size = 0x12000, scoped, tag = 'internal scratch']
  #allocation2 [shape = 'f32[32,32]{1,0:T(8,128)}', space=vmem, size = 0x4000, scoped, tag = 'scratch operand']
  %s0 = inlined_call_operand.vmem [shape: f32[32,8], index: 0, kind: input, shape index: {}]
  %s1 = inlined_call_operand.vmem [shape: f32[8,32], index: 1, kind: input, shape index: {}]
  %s2 = inlined_call_operand.vmem [shape: f32[10,32], index: 2, kind: input, shape index: {}]
  %s3 = inlined_call_operand.vmem [shape: f32[4,128,32], index: 3, kind: input, shape index: {}]
  %s4 = inlined_call_operand.vmem [shape: f32[2,1], index: 4, kind: output, shape index: {}]
  %s5 = sld [smem:[#allocation0]]
  $region26: #{tpu_custom_call.1} parent=0
    _
  %s7 = ssub.s32 1, %s5
  %s8 = scalar_select 0, %s7, %s5
  // Predicated region
  $region2: #{tpu_custom_call.1} parent=0 // pred_check
    _
  $region3: #{tpu_custom_call.1} parent=0 // pred_check_branch
    %10 = sbr.rel (0) target = $region5
  $region4: #{tpu_custom_call.1} parent=0 // pred_region
    _
  $region5: #{tpu_custom_call.1} parent=0 // pred_fallthru
    _
  // Predicated region
  $region6: #{tpu_custom_call.1} parent=0 // pred_check
    _
  $region7: #{tpu_custom_call.1} parent=0 // pred_check_branch
    %12 = sbr.rel (0) target = $region9
  $region8: #{tpu_custom_call.1} parent=0 // pred_region
    _
  $region9: #{tpu_custom_call.1} parent=0 // pred_fallthru
    _
  // Predicated region
  $region10: #{tpu_custom_call.1} parent=0 // pred_check
    _
  $region11: #{tpu_custom_call.1} parent=0 // pred_check_branch
    %14 = sbr.rel (0) target = $region13
  $region12: #{tpu_custom_call.1} parent=0 // pred_region
    _
  $region13: #{tpu_custom_call.1} parent=0 // pred_fallthru
    _
  // Predicated region
  $region14: #{tpu_custom_call.1} parent=0 // pred_check
    _
  $region15: #{tpu_custom_call.1} parent=0 // pred_check_branch
    %16 = sbr.rel (0) target = $region17
  $region16: #{tpu_custom_call.1} parent=0 // pred_region
    _
  $region17: #{tpu_custom_call.1} parent=0 // pred_fallthru
    _
  %v17 = vld [vmem:[%s0] sm:$0xff]
  %v18 = vld [vmem:[%s0 + $0x8] sm:$0xff]
  %v19 = vld [vmem:[%s0 + $0x10] sm:$0xff]
  %v20 = vld [vmem:[%s0 + $0x18] sm:$0xff]
  %v21 = vld [vmem:[%s1] sm:$0xff]
  %v22 = vld [vmem:[%s2] sm:$0x1]
  %v23 = vlaneseq
  %v24 = vshrl.u32 %v23, 7
  %v25 = vsub.s32 0, %v24
  %v26 = vrot.slane %v22, %v25
  %vm27 = vcmask 64512
  %v29 = vsel %vm27, %v17, 0
  %v32 = vsel %vm27, %v18, 0
  %v35 = vsel %vm27, %v19, 0
  %v38 = vsel %vm27, %v20, 0
  %40 = vmatprep.subr.mxu0 0.0
  %41 = vmatpush1.msra.mxu0 %v21
  %42 = vmatprep.subr.mxu0 0.0
  %43 = vmatpush1.msra.mxu0 0.0
  %44 = vmatprep.subr.mxu0 0.0
  %45 = vmatpush1.msra.mxu0 0.0
  %46 = vmatprep.subr.mxu0 0.0
  %47 = vmatpush1.msra.mxu0 0.0
  %48 = vmatprep.subr.mxu0 0.0
  %49 = vmatpush1.msra.mxu0 0.0
  %50 = vmatprep.subr.mxu0 0.0
  %51 = vmatpush1.msra.mxu0 0.0
  %52 = vmatprep.subr.mxu0 0.0
  %53 = vmatpush1.msra.mxu0 0.0
  %54 = vmatprep.subr.mxu0 0.0
  %55 = vmatpush1.msra.mxu0 0.0
  %56 = vmatprep.subr.mxu0 0.0
  %57 = vmatpush1.msra.mxu0 0.0
  %58 = vmatprep.subr.mxu0 0.0
  %59 = vmatpush1.msra.mxu0 0.0
  %60 = vmatprep.subr.mxu0 0.0
  %61 = vmatpush1.msra.mxu0 0.0
  %62 = vmatprep.subr.mxu0 0.0
  %63 = vmatpush1.msra.mxu0 0.0
  %64 = vmatprep.subr.mxu0 0.0
  %65 = vmatpush1.msra.mxu0 0.0
  %66 = vmatprep.subr.mxu0 0.0
  %67 = vmatpush1.msra.mxu0 0.0
  %68 = vmatprep.subr.mxu0 0.0
  %69 = vmatpush1.msra.mxu0 0.0
  %70 = vmatprep.subr.mxu0 0.0
  %71 = vmatpush1.msra.mxu0 0.0
  %72 = vmatprep.subr.mxu0 0.0
  %73 = vmatpush1.msra.mxu0 0.0
  %74 = vmatprep.subr.mxu0 0.0
  %75 = vmatpush1.msra.mxu0 0.0
  %76 = vmatprep.subr.mxu0 0.0
  %77 = vmatpush1.msra.mxu0 0.0
  %78 = vmatprep.subr.mxu0 0.0
  %79 = vmatpush1.msra.mxu0 0.0
  %80 = vmatprep.subr.mxu0 0.0
  %81 = vmatpush1.msra.mxu0 0.0
  %82 = vmatprep.subr.mxu0 0.0
  %83 = vmatpush1.msra.mxu0 0.0
  %84 = vmatprep.subr.mxu0 0.0
  %85 = vmatpush1.msra.mxu0 0.0
  %86 = vmatprep.subr.mxu0 0.0
  %87 = vmatpush1.msra.mxu0 0.0
  %88 = vmatprep.subr.mxu0 0.0
  %89 = vmatpush1.msra.mxu0 0.0
  %90 = vmatprep.subr.mxu0 0.0
  %91 = vmatpush1.msra.mxu0 0.0
  %92 = vmatprep.subr.mxu0 0.0
  %93 = vmatpush1.msra.mxu0 0.0
  %94 = vmatprep.subr.mxu0 0.0
  %95 = vmatpush1.msra.mxu0 0.0
  %96 = vmatprep.subr.mxu0 0.0
  %97 = vmatpush1.msra.mxu0 0.0
  %98 = vmatprep.subr.mxu0 0.0
  %99 = vmatpush1.msra.mxu0 0.0
  %100 = vmatprep.subr.mxu0 0.0
  %101 = vmatpush1.msra.mxu0 0.0
  %102 = vmatprep.subr.mxu0 0.0
  %103 = vmatpush1.msra.mxu0 0.0
  %104 = vmatprep.mubr.f32.mxu0 0.0
  %105 = vmatmul.mubr.f32.gmra.mrb[0].mxu0 %v29
  %v106 = vpop.f32.mrb[0].mxu0
  %v107 = vadd.f32 %v26, %v106
  %v108 = vpop.f32.mrb[0].mxu0
  %109 = vmatprep.mubr.f32.mxu0 0.0
  %110 = vmatmul.mubr.f32.gmra.mrb[0].mxu0 %v32
  %v111 = vpop.f32.mrb[0].mxu0
  %v112 = vadd.f32 %v26, %v111
  %v113 = vpop.f32.mrb[0].mxu0
  %114 = vmatprep.mubr.f32.mxu0 0.0
  %115 = vmatmul.mubr.f32.gmra.mrb[0].mxu0 %v35
  %v116 = vpop.f32.mrb[0].mxu0
  %v117 = vadd.f32 %v26, %v116
  %v118 = vpop.f32.mrb[0].mxu0
  %119 = vmatprep.mubr.f32.mxu0 0.0
  %120 = vmatmul.mubr.f32.gmra.mrb[0].mxu0 %v38
  %v121 = vpop.f32.mrb[0].mxu0
  %v122 = vadd.f32 %v26, %v121
  %v123 = vpop.f32.mrb[0].mxu0
  %124 = vdwg.mxu0
  %v125 = vlaneseq
  %v126 = vshrl.u32 %v125, 7
  %v127 = vadd.s32 %v126, 8
  %v128 = vadd.s32 %v126, 16
  %v129 = vadd.s32 %v126, 24
  %vm130 = vcmp.lt.s32.totalorder %v126, 0
  %v131 = vsub.s32 0, %v126
  %v132 = vsel %vm130, %v131, %v126
  %v133 = vshrl.u32 %v132, 4
  %v134 = vand.u32 %v132, 15
  %v135 = vsub.s32 0, %v134
  %v136 = vsel %vm130, %v135, %v134
  %vm137 = vcmp.lt.s32.totalorder %v127, 0
  %v138 = vsub.s32 0, %v127
  %v139 = vsel %vm137, %v138, %v127
  %v140 = vshrl.u32 %v139, 4
  %v141 = vand.u32 %v139, 15
  %v142 = vsub.s32 0, %v141
  %v143 = vsel %vm137, %v142, %v141
  %vm144 = vcmp.lt.s32.totalorder %v128, 0
  %v145 = vsub.s32 0, %v128
  %v146 = vsel %vm144, %v145, %v128
  %v147 = vshrl.u32 %v146, 4
  %v148 = vand.u32 %v146, 15
  %v149 = vsub.s32 0, %v148
  %v150 = vsel %vm144, %v149, %v148
  %vm151 = vcmp.lt.s32.totalorder %v129, 0
  %v152 = vsub.s32 0, %v129
  %v153 = vsel %vm151, %v152, %v129
  %v154 = vshrl.u32 %v153, 4
  %v155 = vand.u32 %v153, 15
  %v156 = vsub.s32 0, %v155
  %v157 = vsel %vm151, %v156, %v155
  %vm158 = vcmp.ne.s32.totalorder %v136, 0
  %vm159 = vcmp.ne.s32.totalorder %v143, 0
  %vm160 = vcmp.ne.s32.totalorder %v150, 0
  %vm161 = vcmp.ne.s32.totalorder %v157, 0
  %vm162 = vcmp.lt.s32.totalorder %v136, 0
  %vm163 = vcmp.lt.s32.totalorder %v143, 0
  %vm164 = vcmp.lt.s32.totalorder %v150, 0
  %vm165 = vcmp.lt.s32.totalorder %v157, 0
  %vm166 = vmand %vm162, %vm158
  %vm167 = vmand %vm163, %vm159
  %vm168 = vmand %vm164, %vm160
  %vm169 = vmand %vm165, %vm161
  %v170 = vadd.s32 %v136, 16
  %v171 = vadd.s32 %v143, 16
  %v172 = vadd.s32 %v150, 16
  %v173 = vadd.s32 %v157, 16
  %v174 = vsel %vm166, %v170, %v136
  %v175 = vsel %vm167, %v171, %v143
  %v176 = vsel %vm168, %v172, %v150
  %v177 = vsel %vm169, %v173, %v157
  %v178 = vld [vmem:[%s3] sm:$0xff]
  %v179 = vld [vmem:[%s3 + $0x8] sm:$0xff]
  %v180 = vld [vmem:[%s3 + $0x10] sm:$0xff]
  %v181 = vld [vmem:[%s3 + $0x18] sm:$0xff]
  %v182 = vld [vmem:[%s3 + $0x20] sm:$0xff]
  %v183 = vld [vmem:[%s3 + $0x28] sm:$0xff]
  %v184 = vld [vmem:[%s3 + $0x30] sm:$0xff]
  %v185 = vld [vmem:[%s3 + $0x38] sm:$0xff]
  %v186 = vld [vmem:[%s3 + $0x40] sm:$0xff]
  %v187 = vld [vmem:[%s3 + $0x48] sm:$0xff]
  %v188 = vld [vmem:[%s3 + $0x50] sm:$0xff]
  %v189 = vld [vmem:[%s3 + $0x58] sm:$0xff]
  %v190 = vld [vmem:[%s3 + $0x60] sm:$0xff]
  %v191 = vld [vmem:[%s3 + $0x68] sm:$0xff]
  %v192 = vld [vmem:[%s3 + $0x70] sm:$0xff]
  %v193 = vld [vmem:[%s3 + $0x78] sm:$0xff]
  %vm194 = vcmp.ge.s32.totalorder %v174, 1
  %vm195 = vcmp.ge.s32.totalorder %v175, 1
  %vm196 = vcmp.ge.s32.totalorder %v176, 1
  %vm197 = vcmp.ge.s32.totalorder %v177, 1
  %v198 = vrot.slane %v107, 7
  %v199 = vrot.slane %v112, 7
  %v200 = vrot.slane %v117, 7
  %v201 = vrot.slane %v122, 7
  %vm202 = vcmp.lt.s32.totalorder %v126, 1
  %v203 = vsel %vm202, %v200, %v201
  %v204 = vsel %vm202, %v199, %v200
  %v205 = vsel %vm202, %v198, %v199
  %v206 = vsel %vm202, %v201, %v198
  %v207 = vsel %vm194, 1, 0
  %v208 = vsel %vm195, 1, 0
  %v209 = vsel %vm196, 1, 0
  %v210 = vsel %vm197, 1, 0
  %vm211 = vcmp.eq.s32.totalorder %v207, 1
  %vm212 = vcmp.eq.s32.totalorder %v208, 1
  %vm213 = vcmp.eq.s32.totalorder %v209, 1
  %vm214 = vcmp.eq.s32.totalorder %v210, 1
  %v215 = vsel %vm211, %v206, 0.0
  %v216 = vsel %vm212, %v205, 0.0
  %v217 = vsel %vm213, %v204, 0.0
  %v218 = vsel %vm214, %v203, 0.0
  %vm219 = vcmp.lt.s32.totalorder %v174, 15
  %vm220 = vcmp.lt.s32.totalorder %v175, 15
  %vm221 = vcmp.lt.s32.totalorder %v176, 15
  %vm222 = vcmp.lt.s32.totalorder %v177, 15
  %v223 = vrot.slane %v107, 1
  %v224 = vrot.slane %v112, 1
  %v225 = vrot.slane %v117, 1
  %v226 = vrot.slane %v122, 1
  %vm227 = vcmp.lt.s32.totalorder %v126, 7
  %v228 = vsel %vm227, %v225, %v226
  %v229 = vsel %vm227, %v224, %v225
  %v230 = vsel %vm227, %v223, %v224
  %v231 = vsel %vm227, %v226, %v223
  %v232 = vsel %vm219, 1, 0
  %v233 = vsel %vm220, 1, 0
  %v234 = vsel %vm221, 1, 0
  %v235 = vsel %vm222, 1, 0
  %vm236 = vcmp.eq.s32.totalorder %v232, 1
  %vm237 = vcmp.eq.s32.totalorder %v233, 1
  %vm238 = vcmp.eq.s32.totalorder %v234, 1
  %vm239 = vcmp.eq.s32.totalorder %v235, 1
  %v240 = vsel %vm236, %v230, 0.0
  %v241 = vsel %vm237, %v229, 0.0
  %v242 = vsel %vm238, %v228, 0.0
  %v243 = vsel %vm239, %v231, 0.0
  %248 = vrot.lane.b32.xlu0 %v107, 32
  %v249 = vpop.permute.xlu0 %248
  %250 = vrot.lane.b32.xlu0 %v112, 32
  %v251 = vpop.permute.xlu0 %250
  %252 = vrot.lane.b32.xlu0 %v117, 32
  %v253 = vpop.permute.xlu0 %252
  %254 = vrot.lane.b32.xlu0 %v122, 32
  %v255 = vpop.permute.xlu0 %254
  %264 = vrot.lane.b32.xlu0 %v240, 64
  %v265 = vpop.permute.xlu0 %264
  %266 = vrot.lane.b32.xlu0 %v241, 64
  %v267 = vpop.permute.xlu0 %266
  %268 = vrot.lane.b32.xlu0 %v242, 64
  %v269 = vpop.permute.xlu0 %268
  %270 = vrot.lane.b32.xlu0 %v243, 64
  %v271 = vpop.permute.xlu0 %270
  %vm276 = vcmask 261120
  %v277 = vsel %vm276, %v215, %v249
  %v278 = vsel %vm276, %v216, %v251
  %v279 = vsel %vm276, %v217, %v253
  %v280 = vsel %vm276, %v218, %v255
  %vm281 = vcmask 523264
  %v282 = vsel %vm281, %v277, %v265
  %v283 = vsel %vm281, %v278, %v267
  %v284 = vsel %vm281, %v279, %v269
  %v285 = vsel %vm281, %v280, %v271
  %v286 = vld [vmem:[%s2 + $0x1] sm:$0x1]
  %v287 = vlaneseq
  %v288 = vshrl.u32 %v287, 7
  %v289 = vsub.s32 0, %v288
  %v290 = vrot.slane %v286, %v289
  %vm291 = vcmask 785408
  %v293 = vsel %vm291, %v282, 0
  %v296 = vsel %vm291, %v283, 0
  %v299 = vsel %vm291, %v284, 0
  %v302 = vsel %vm291, %v285, 0
  %304 = vmatprep.subr.mxu0 0.0
  %305 = vmatpush1.msra.mxu0 %v178
  %306 = vmatprep.subr.mxu0 0.0
  %307 = vmatpush1.msra.mxu0 %v179
  %308 = vmatprep.subr.mxu0 0.0
  %309 = vmatpush1.msra.mxu0 %v180
  %310 = vmatprep.subr.mxu0 0.0
  %311 = vmatpush1.msra.mxu0 %v181
  %312 = vmatprep.subr.mxu0 0.0
  %313 = vmatpush1.msra.mxu0 %v182
  %314 = vmatprep.subr.mxu0 0.0
  %315 = vmatpush1.msra.mxu0 %v183
  %316 = vmatprep.subr.mxu0 0.0
  %317 = vmatpush1.msra.mxu0 %v184
  %318 = vmatprep.subr.mxu0 0.0
  %319 = vmatpush1.msra.mxu0 %v185
  %320 = vmatprep.subr.mxu0 0.0
  %321 = vmatpush1.msra.mxu0 %v186
  %322 = vmatprep.subr.mxu0 0.0
  %323 = vmatpush1.msra.mxu0 %v187
  %324 = vmatprep.subr.mxu0 0.0
  %325 = vmatpush1.msra.mxu0 %v188
  %326 = vmatprep.subr.mxu0 0.0
  %327 = vmatpush1.msra.mxu0 %v189
  %328 = vmatprep.subr.mxu0 0.0
  %329 = vmatpush1.msra.mxu0 0.0
  %330 = vmatprep.subr.mxu0 0.0
  %331 = vmatpush1.msra.mxu0 0.0
  %332 = vmatprep.subr.mxu0 0.0
  %333 = vmatpush1.msra.mxu0 0.0
  %334 = vmatprep.subr.mxu0 0.0
  %335 = vmatpush1.msra.mxu0 0.0
  %336 = vmatprep.subr.mxu0 0.0
  %337 = vmatpush1.msra.mxu0 0.0
  %338 = vmatprep.subr.mxu0 0.0
  %339 = vmatpush1.msra.mxu0 0.0
  %340 = vmatprep.subr.mxu0 0.0
  %341 = vmatpush1.msra.mxu0 0.0
  %342 = vmatprep.subr.mxu0 0.0
  %343 = vmatpush1.msra.mxu0 0.0
  %344 = vmatprep.subr.mxu0 0.0
  %345 = vmatpush1.msra.mxu0 0.0
  %346 = vmatprep.subr.mxu0 0.0
  %347 = vmatpush1.msra.mxu0 0.0
  %348 = vmatprep.subr.mxu0 0.0
  %349 = vmatpush1.msra.mxu0 0.0
  %350 = vmatprep.subr.mxu0 0.0
  %351 = vmatpush1.msra.mxu0 0.0
  %352 = vmatprep.subr.mxu0 0.0
  %353 = vmatpush1.msra.mxu0 0.0
  %354 = vmatprep.subr.mxu0 0.0
  %355 = vmatpush1.msra.mxu0 0.0
  %356 = vmatprep.subr.mxu0 0.0
  %357 = vmatpush1.msra.mxu0 0.0
  %358 = vmatprep.subr.mxu0 0.0
  %359 = vmatpush1.msra.mxu0 0.0
  %360 = vmatprep.subr.mxu0 0.0
  %361 = vmatpush1.msra.mxu0 0.0
  %362 = vmatprep.subr.mxu0 0.0
  %363 = vmatpush1.msra.mxu0 0.0
  %364 = vmatprep.subr.mxu0 0.0
  %365 = vmatpush1.msra.mxu0 0.0
  %366 = vmatprep.subr.mxu0 0.0
  %367 = vmatpush1.msra.mxu0 0.0
  %368 = vmatprep.mubr.f32.mxu0 0.0
  %369 = vmatmul.mubr.f32.gmra.mrb[0].mxu0 %v293
  %v370 = vpop.f32.mrb[0].mxu0
  %v371 = vadd.f32 %v290, %v370
  %v372 = vpop.f32.mrb[0].mxu0
  %373 = vmatprep.mubr.f32.mxu0 0.0
  %374 = vmatmul.mubr.f32.gmra.mrb[0].mxu0 %v296
  %v375 = vpop.f32.mrb[0].mxu0
  %v376 = vadd.f32 %v290, %v375
  %v377 = vpop.f32.mrb[0].mxu0
  %378 = vmatprep.mubr.f32.mxu0 0.0
  %379 = vmatmul.mubr.f32.gmra.mrb[0].mxu0 %v299
  %v380 = vpop.f32.mrb[0].mxu0
  %v381 = vadd.f32 %v290, %v380
  %v382 = vpop.f32.mrb[0].mxu0
  %383 = vmatprep.mubr.f32.mxu0 0.0
  %384 = vmatmul.mubr.f32.gmra.mrb[0].mxu0 %v302
  %v385 = vpop.f32.mrb[0].mxu0
  %v386 = vadd.f32 %v290, %v385
  %v387 = vpop.f32.mrb[0].mxu0
  %388 = vdwg.mxu0
  %v389 = vmax.f32 %v371, 0.0
  %v390 = vmax.f32 %v376, 0.0
  %v391 = vmax.f32 %v381, 0.0
  %v392 = vmax.f32 %v386, 0.0
  %v393 = vld [vmem:[%s2 + $0x4] sm:$0x1]
  %v394 = vlaneseq
  %v395 = vshrl.u32 %v394, 7
  %v396 = vsub.s32 0, %v395
  %v397 = vrot.slane %v393, %v396
  %v399 = vsel %vm276, %v389, 0
  %v402 = vsel %vm276, %v390, 0
  %v405 = vsel %vm276, %v391, 0
  %v408 = vsel %vm276, %v392, 0
  %410 = vmatprep.subr.mxu0 0.0
  %411 = vmatpush1.msra.mxu0 %v190
  %412 = vmatprep.subr.mxu0 0.0
  %413 = vmatpush1.msra.mxu0 %v191
  %414 = vmatprep.subr.mxu0 0.0
  %415 = vmatpush1.msra.mxu0 %v192
  %416 = vmatprep.subr.mxu0 0.0
  %417 = vmatpush1.msra.mxu0 %v193
  %418 = vmatprep.subr.mxu0 0.0
  %419 = vmatpush1.msra.mxu0 0.0
  %420 = vmatprep.subr.mxu0 0.0
  %421 = vmatpush1.msra.mxu0 0.0
  %422 = vmatprep.subr.mxu0 0.0
  %423 = vmatpush1.msra.mxu0 0.0
  %424 = vmatprep.subr.mxu0 0.0
  %425 = vmatpush1.msra.mxu0 0.0
  %426 = vmatprep.subr.mxu0 0.0
  %427 = vmatpush1.msra.mxu0 0.0
  %428 = vmatprep.subr.mxu0 0.0
  %429 = vmatpush1.msra.mxu0 0.0
  %430 = vmatprep.subr.mxu0 0.0
  %431 = vmatpush1.msra.mxu0 0.0
  %432 = vmatprep.subr.mxu0 0.0
  %433 = vmatpush1.msra.mxu0 0.0
  %434 = vmatprep.subr.mxu0 0.0
  %435 = vmatpush1.msra.mxu0 0.0
  %436 = vmatprep.subr.mxu0 0.0
  %437 = vmatpush1.msra.mxu0 0.0
  %438 = vmatprep.subr.mxu0 0.0
  %439 = vmatpush1.msra.mxu0 0.0
  %440 = vmatprep.subr.mxu0 0.0
  %441 = vmatpush1.msra.mxu0 0.0
  %442 = vmatprep.subr.mxu0 0.0
  %443 = vmatpush1.msra.mxu0 0.0
  %444 = vmatprep.subr.mxu0 0.0
  %445 = vmatpush1.msra.mxu0 0.0
  %446 = vmatprep.subr.mxu0 0.0
  %447 = vmatpush1.msra.mxu0 0.0
  %448 = vmatprep.subr.mxu0 0.0
  %449 = vmatpush1.msra.mxu0 0.0
  %450 = vmatprep.subr.mxu0 0.0
  %451 = vmatpush1.msra.mxu0 0.0
  %452 = vmatprep.subr.mxu0 0.0
  %453 = vmatpush1.msra.mxu0 0.0
  %454 = vmatprep.subr.mxu0 0.0
  %455 = vmatpush1.msra.mxu0 0.0
  %456 = vmatprep.subr.mxu0 0.0
  %457 = vmatpush1.msra.mxu0 0.0
  %458 = vmatprep.subr.mxu0 0.0
  %459 = vmatpush1.msra.mxu0 0.0
  %460 = vmatprep.subr.mxu0 0.0
  %461 = vmatpush1.msra.mxu0 0.0
  %462 = vmatprep.subr.mxu0 0.0
  %463 = vmatpush1.msra.mxu0 0.0
  %464 = vmatprep.subr.mxu0 0.0
  %465 = vmatpush1.msra.mxu0 0.0
  %466 = vmatprep.subr.mxu0 0.0
  %467 = vmatpush1.msra.mxu0 0.0
  %468 = vmatprep.subr.mxu0 0.0
  %469 = vmatpush1.msra.mxu0 0.0
  %470 = vmatprep.subr.mxu0 0.0
  %471 = vmatpush1.msra.mxu0 0.0
  %472 = vmatprep.subr.mxu0 0.0
  %473 = vmatpush1.msra.mxu0 0.0
  %474 = vmatprep.mubr.f32.mxu0 0.0
  %475 = vmatmul.mubr.f32.gmra.mrb[0].mxu0 %v399
  %v476 = vpop.f32.mrb[0].mxu0
  %v477 = vadd.f32 %v397, %v476
  %v478 = vpop.f32.mrb[0].mxu0
  %479 = vmatprep.mubr.f32.mxu0 0.0
  %480 = vmatmul.mubr.f32.gmra.mrb[0].mxu0 %v402
  %v481 = vpop.f32.mrb[0].mxu0
  %v482 = vadd.f32 %v397, %v481
  %v483 = vpop.f32.mrb[0].mxu0
  %484 = vmatprep.mubr.f32.mxu0 0.0
  %485 = vmatmul.mubr.f32.gmra.mrb[0].mxu0 %v405
  %v486 = vpop.f32.mrb[0].mxu0
  %v487 = vadd.f32 %v397, %v486
  %v488 = vpop.f32.mrb[0].mxu0
  %489 = vmatprep.mubr.f32.mxu0 0.0
  %490 = vmatmul.mubr.f32.gmra.mrb[0].mxu0 %v408
  %v491 = vpop.f32.mrb[0].mxu0
  %v492 = vadd.f32 %v397, %v491
  %v493 = vpop.f32.mrb[0].mxu0
  %494 = vdwg.mxu0
  %s495 = scalar_lea.vmem %s3, 128
  %v496 = vld [vmem:[%s495] sm:$0xff]
  %v497 = vld [vmem:[%s495 + $0x8] sm:$0xff]
  %v498 = vld [vmem:[%s495 + $0x10] sm:$0xff]
  %v499 = vld [vmem:[%s495 + $0x18] sm:$0xff]
  %v500 = vld [vmem:[%s495 + $0x20] sm:$0xff]
  %v501 = vld [vmem:[%s495 + $0x28] sm:$0xff]
  %v502 = vld [vmem:[%s495 + $0x30] sm:$0xff]
  %v503 = vld [vmem:[%s495 + $0x38] sm:$0xff]
  %v504 = vld [vmem:[%s495 + $0x40] sm:$0xff]
  %v505 = vld [vmem:[%s495 + $0x48] sm:$0xff]
  %v506 = vld [vmem:[%s495 + $0x50] sm:$0xff]
  %v507 = vld [vmem:[%s495 + $0x58] sm:$0xff]
  %v508 = vld [vmem:[%s495 + $0x60] sm:$0xff]
  %v509 = vld [vmem:[%s495 + $0x68] sm:$0xff]
  %v510 = vld [vmem:[%s495 + $0x70] sm:$0xff]
  %v511 = vld [vmem:[%s495 + $0x78] sm:$0xff]
  %vm512 = vcmp.ge.s32.totalorder %v174, 2
  %vm513 = vcmp.ge.s32.totalorder %v175, 2
  %vm514 = vcmp.ge.s32.totalorder %v176, 2
  %vm515 = vcmp.ge.s32.totalorder %v177, 2
  %v516 = vrot.slane %v477, 6
  %v517 = vrot.slane %v482, 6
  %v518 = vrot.slane %v487, 6
  %v519 = vrot.slane %v492, 6
  %vm520 = vcmp.lt.s32.totalorder %v126, 2
  %v521 = vsel %vm520, %v518, %v519
  %v522 = vsel %vm520, %v517, %v518
  %v523 = vsel %vm520, %v516, %v517
  %v524 = vsel %vm520, %v519, %v516
  %v525 = vsel %vm512, 1, 0
  %v526 = vsel %vm513, 1, 0
  %v527 = vsel %vm514, 1, 0
  %v528 = vsel %vm515, 1, 0
  %vm529 = vcmp.eq.s32.totalorder %v525, 1
  %vm530 = vcmp.eq.s32.totalorder %v526, 1
  %vm531 = vcmp.eq.s32.totalorder %v527, 1
  %vm532 = vcmp.eq.s32.totalorder %v528, 1
  %v533 = vsel %vm529, %v524, 0.0
  %v534 = vsel %vm530, %v523, 0.0
  %v535 = vsel %vm531, %v522, 0.0
  %v536 = vsel %vm532, %v521, 0.0
  %vm537 = vcmp.lt.s32.totalorder %v174, 14
  %vm538 = vcmp.lt.s32.totalorder %v175, 14
  %vm539 = vcmp.lt.s32.totalorder %v176, 14
  %vm540 = vcmp.lt.s32.totalorder %v177, 14
  %v541 = vrot.slane %v477, 2
  %v542 = vrot.slane %v482, 2
  %v543 = vrot.slane %v487, 2
  %v544 = vrot.slane %v492, 2
  %vm545 = vcmp.lt.s32.totalorder %v126, 6
  %v546 = vsel %vm545, %v543, %v544
  %v547 = vsel %vm545, %v542, %v543
  %v548 = vsel %vm545, %v541, %v542
  %v549 = vsel %vm545, %v544, %v541
  %v550 = vsel %vm537, 1, 0
  %v551 = vsel %vm538, 1, 0
  %v552 = vsel %vm539, 1, 0
  %v553 = vsel %vm540, 1, 0
  %vm554 = vcmp.eq.s32.totalorder %v550, 1
  %vm555 = vcmp.eq.s32.totalorder %v551, 1
  %vm556 = vcmp.eq.s32.totalorder %v552, 1
  %vm557 = vcmp.eq.s32.totalorder %v553, 1
  %v558 = vsel %vm554, %v548, 0.0
  %v559 = vsel %vm555, %v547, 0.0
  %v560 = vsel %vm556, %v546, 0.0
  %v561 = vsel %vm557, %v549, 0.0
  %566 = vrot.lane.b32.xlu0 %v477, 32
  %v567 = vpop.permute.xlu0 %566
  %568 = vrot.lane.b32.xlu0 %v482, 32
  %v569 = vpop.permute.xlu0 %568
  %570 = vrot.lane.b32.xlu0 %v487, 32
  %v571 = vpop.permute.xlu0 %570
  %572 = vrot.lane.b32.xlu0 %v492, 32
  %v573 = vpop.permute.xlu0 %572
  %582 = vrot.lane.b32.xlu0 %v558, 64
  %v583 = vpop.permute.xlu0 %582
  %584 = vrot.lane.b32.xlu0 %v559, 64
  %v585 = vpop.permute.xlu0 %584
  %586 = vrot.lane.b32.xlu0 %v560, 64
  %v587 = vpop.permute.xlu0 %586
  %588 = vrot.lane.b32.xlu0 %v561, 64
  %v589 = vpop.permute.xlu0 %588
  %v594 = vsel %vm276, %v533, %v567
  %v595 = vsel %vm276, %v534, %v569
  %v596 = vsel %vm276, %v535, %v571
  %v597 = vsel %vm276, %v536, %v573
  %v598 = vsel %vm281, %v594, %v583
  %v599 = vsel %vm281, %v595, %v585
  %v600 = vsel %vm281, %v596, %v587
  %v601 = vsel %vm281, %v597, %v589
  %v602 = vld [vmem:[%s2 + $0x2] sm:$0x1]
  %v603 = vlaneseq
  %v604 = vshrl.u32 %v603, 7
  %v605 = vsub.s32 0, %v604
  %v606 = vrot.slane %v602, %v605
  %v608 = vsel %vm291, %v598, 0
  %v611 = vsel %vm291, %v599, 0
  %v614 = vsel %vm291, %v600, 0
  %v617 = vsel %vm291, %v601, 0
  %619 = vmatprep.subr.mxu0 0.0
  %620 = vmatpush1.msra.mxu0 %v496
  %621 = vmatprep.subr.mxu0 0.0
  %622 = vmatpush1.msra.mxu0 %v497
  %623 = vmatprep.subr.mxu0 0.0
  %624 = vmatpush1.msra.mxu0 %v498
  %625 = vmatprep.subr.mxu0 0.0
  %626 = vmatpush1.msra.mxu0 %v499
  %627 = vmatprep.subr.mxu0 0.0
  %628 = vmatpush1.msra.mxu0 %v500
  %629 = vmatprep.subr.mxu0 0.0
  %630 = vmatpush1.msra.mxu0 %v501
  %631 = vmatprep.subr.mxu0 0.0
  %632 = vmatpush1.msra.mxu0 %v502
  %633 = vmatprep.subr.mxu0 0.0
  %634 = vmatpush1.msra.mxu0 %v503
  %635 = vmatprep.subr.mxu0 0.0
  %636 = vmatpush1.msra.mxu0 %v504
  %637 = vmatprep.subr.mxu0 0.0
  %638 = vmatpush1.msra.mxu0 %v505
  %639 = vmatprep.subr.mxu0 0.0
  %640 = vmatpush1.msra.mxu0 %v506
  %641 = vmatprep.subr.mxu0 0.0
  %642 = vmatpush1.msra.mxu0 %v507
  %643 = vmatprep.subr.mxu0 0.0
  %644 = vmatpush1.msra.mxu0 0.0
  %645 = vmatprep.subr.mxu0 0.0
  %646 = vmatpush1.msra.mxu0 0.0
  %647 = vmatprep.subr.mxu0 0.0
  %648 = vmatpush1.msra.mxu0 0.0
  %649 = vmatprep.subr.mxu0 0.0
  %650 = vmatpush1.msra.mxu0 0.0
  %651 = vmatprep.subr.mxu0 0.0
  %652 = vmatpush1.msra.mxu0 0.0
  %653 = vmatprep.subr.mxu0 0.0
  %654 = vmatpush1.msra.mxu0 0.0
  %655 = vmatprep.subr.mxu0 0.0
  %656 = vmatpush1.msra.mxu0 0.0
  %657 = vmatprep.subr.mxu0 0.0
  %658 = vmatpush1.msra.mxu0 0.0
  %659 = vmatprep.subr.mxu0 0.0
  %660 = vmatpush1.msra.mxu0 0.0
  %661 = vmatprep.subr.mxu0 0.0
  %662 = vmatpush1.msra.mxu0 0.0
  %663 = vmatprep.subr.mxu0 0.0
  %664 = vmatpush1.msra.mxu0 0.0
  %665 = vmatprep.subr.mxu0 0.0
  %666 = vmatpush1.msra.mxu0 0.0
  %667 = vmatprep.subr.mxu0 0.0
  %668 = vmatpush1.msra.mxu0 0.0
  %669 = vmatprep.subr.mxu0 0.0
  %670 = vmatpush1.msra.mxu0 0.0
  %671 = vmatprep.subr.mxu0 0.0
  %672 = vmatpush1.msra.mxu0 0.0
  %673 = vmatprep.subr.mxu0 0.0
  %674 = vmatpush1.msra.mxu0 0.0
  %675 = vmatprep.subr.mxu0 0.0
  %676 = vmatpush1.msra.mxu0 0.0
  %677 = vmatprep.subr.mxu0 0.0
  %678 = vmatpush1.msra.mxu0 0.0
  %679 = vmatprep.subr.mxu0 0.0
  %680 = vmatpush1.msra.mxu0 0.0
  %681 = vmatprep.subr.mxu0 0.0
  %682 = vmatpush1.msra.mxu0 0.0
  %683 = vmatprep.mubr.f32.mxu0 0.0
  %684 = vmatmul.mubr.f32.gmra.mrb[0].mxu0 %v608
  %v685 = vpop.f32.mrb[0].mxu0
  %v686 = vadd.f32 %v606, %v685
  %v687 = vpop.f32.mrb[0].mxu0
  %688 = vmatprep.mubr.f32.mxu0 0.0
  %689 = vmatmul.mubr.f32.gmra.mrb[0].mxu0 %v611
  %v690 = vpop.f32.mrb[0].mxu0
  %v691 = vadd.f32 %v606, %v690
  %v692 = vpop.f32.mrb[0].mxu0
  %693 = vmatprep.mubr.f32.mxu0 0.0
  %694 = vmatmul.mubr.f32.gmra.mrb[0].mxu0 %v614
  %v695 = vpop.f32.mrb[0].mxu0
  %v696 = vadd.f32 %v606, %v695
  %v697 = vpop.f32.mrb[0].mxu0
  %698 = vmatprep.mubr.f32.mxu0 0.0
  %699 = vmatmul.mubr.f32.gmra.mrb[0].mxu0 %v617
  %v700 = vpop.f32.mrb[0].mxu0
  %v701 = vadd.f32 %v606, %v700
  %v702 = vpop.f32.mrb[0].mxu0
  %703 = vdwg.mxu0
  %v704 = vmax.f32 %v686, 0.0
  %v705 = vmax.f32 %v691, 0.0
  %v706 = vmax.f32 %v696, 0.0
  %v707 = vmax.f32 %v701, 0.0
  %v708 = vld [vmem:[%s2 + $0x5] sm:$0x1]
  %v709 = vlaneseq
  %v710 = vshrl.u32 %v709, 7
  %v711 = vsub.s32 0, %v710
  %v712 = vrot.slane %v708, %v711
  %v714 = vsel %vm276, %v704, 0
  %v717 = vsel %vm276, %v705, 0
  %v720 = vsel %vm276, %v706, 0
  %v723 = vsel %vm276, %v707, 0
  %725 = vmatprep.subr.mxu0 0.0
  %726 = vmatpush1.msra.mxu0 %v508
  %727 = vmatprep.subr.mxu0 0.0
  %728 = vmatpush1.msra.mxu0 %v509
  %729 = vmatprep.subr.mxu0 0.0
  %730 = vmatpush1.msra.mxu0 %v510
  %731 = vmatprep.subr.mxu0 0.0
  %732 = vmatpush1.msra.mxu0 %v511
  %733 = vmatprep.subr.mxu0 0.0
  %734 = vmatpush1.msra.mxu0 0.0
  %735 = vmatprep.subr.mxu0 0.0
  %736 = vmatpush1.msra.mxu0 0.0
  %737 = vmatprep.subr.mxu0 0.0
  %738 = vmatpush1.msra.mxu0 0.0
  %739 = vmatprep.subr.mxu0 0.0
  %740 = vmatpush1.msra.mxu0 0.0
  %741 = vmatprep.subr.mxu0 0.0
  %742 = vmatpush1.msra.mxu0 0.0
  %743 = vmatprep.subr.mxu0 0.0
  %744 = vmatpush1.msra.mxu0 0.0
  %745 = vmatprep.subr.mxu0 0.0
  %746 = vmatpush1.msra.mxu0 0.0
  %747 = vmatprep.subr.mxu0 0.0
  %748 = vmatpush1.msra.mxu0 0.0
  %749 = vmatprep.subr.mxu0 0.0
  %750 = vmatpush1.msra.mxu0 0.0
  %751 = vmatprep.subr.mxu0 0.0
  %752 = vmatpush1.msra.mxu0 0.0
  %753 = vmatprep.subr.mxu0 0.0
  %754 = vmatpush1.msra.mxu0 0.0
  %755 = vmatprep.subr.mxu0 0.0
  %756 = vmatpush1.msra.mxu0 0.0
  %757 = vmatprep.subr.mxu0 0.0
  %758 = vmatpush1.msra.mxu0 0.0
  %759 = vmatprep.subr.mxu0 0.0
  %760 = vmatpush1.msra.mxu0 0.0
  %761 = vmatprep.subr.mxu0 0.0
  %762 = vmatpush1.msra.mxu0 0.0
  %763 = vmatprep.subr.mxu0 0.0
  %764 = vmatpush1.msra.mxu0 0.0
  %765 = vmatprep.subr.mxu0 0.0
  %766 = vmatpush1.msra.mxu0 0.0
  %767 = vmatprep.subr.mxu0 0.0
  %768 = vmatpush1.msra.mxu0 0.0
  %769 = vmatprep.subr.mxu0 0.0
  %770 = vmatpush1.msra.mxu0 0.0
  %771 = vmatprep.subr.mxu0 0.0
  %772 = vmatpush1.msra.mxu0 0.0
  %773 = vmatprep.subr.mxu0 0.0
  %774 = vmatpush1.msra.mxu0 0.0
  %775 = vmatprep.subr.mxu0 0.0
  %776 = vmatpush1.msra.mxu0 0.0
  %777 = vmatprep.subr.mxu0 0.0
  %778 = vmatpush1.msra.mxu0 0.0
  %779 = vmatprep.subr.mxu0 0.0
  %780 = vmatpush1.msra.mxu0 0.0
  %781 = vmatprep.subr.mxu0 0.0
  %782 = vmatpush1.msra.mxu0 0.0
  %783 = vmatprep.subr.mxu0 0.0
  %784 = vmatpush1.msra.mxu0 0.0
  %785 = vmatprep.subr.mxu0 0.0
  %786 = vmatpush1.msra.mxu0 0.0
  %787 = vmatprep.subr.mxu0 0.0
  %788 = vmatpush1.msra.mxu0 0.0
  %789 = vmatprep.mubr.f32.mxu0 0.0
  %790 = vmatmul.mubr.f32.gmra.mrb[0].mxu0 %v714
  %v791 = vpop.f32.mrb[0].mxu0
  %v792 = vadd.f32 %v712, %v791
  %v793 = vpop.f32.mrb[0].mxu0
  %794 = vmatprep.mubr.f32.mxu0 0.0
  %795 = vmatmul.mubr.f32.gmra.mrb[0].mxu0 %v717
  %v796 = vpop.f32.mrb[0].mxu0
  %v797 = vadd.f32 %v712, %v796
  %v798 = vpop.f32.mrb[0].mxu0
  %799 = vmatprep.mubr.f32.mxu0 0.0
  %800 = vmatmul.mubr.f32.gmra.mrb[0].mxu0 %v720
  %v801 = vpop.f32.mrb[0].mxu0
  %v802 = vadd.f32 %v712, %v801
  %v803 = vpop.f32.mrb[0].mxu0
  %804 = vmatprep.mubr.f32.mxu0 0.0
  %805 = vmatmul.mubr.f32.gmra.mrb[0].mxu0 %v723
  %v806 = vpop.f32.mrb[0].mxu0
  %v807 = vadd.f32 %v712, %v806
  %v808 = vpop.f32.mrb[0].mxu0
  %809 = vdwg.mxu0
  %s810 = scalar_lea.vmem %s3, 256
  %v811 = vld [vmem:[%s810] sm:$0xff]
  %v812 = vld [vmem:[%s810 + $0x8] sm:$0xff]
  %v813 = vld [vmem:[%s810 + $0x10] sm:$0xff]
  %v814 = vld [vmem:[%s810 + $0x18] sm:$0xff]
  %v815 = vld [vmem:[%s810 + $0x20] sm:$0xff]
  %v816 = vld [vmem:[%s810 + $0x28] sm:$0xff]
  %v817 = vld [vmem:[%s810 + $0x30] sm:$0xff]
  %v818 = vld [vmem:[%s810 + $0x38] sm:$0xff]
  %v819 = vld [vmem:[%s810 + $0x40] sm:$0xff]
  %v820 = vld [vmem:[%s810 + $0x48] sm:$0xff]
  %v821 = vld [vmem:[%s810 + $0x50] sm:$0xff]
  %v822 = vld [vmem:[%s810 + $0x58] sm:$0xff]
  %v823 = vld [vmem:[%s810 + $0x60] sm:$0xff]
  %v824 = vld [vmem:[%s810 + $0x68] sm:$0xff]
  %v825 = vld [vmem:[%s810 + $0x70] sm:$0xff]
  %v826 = vld [vmem:[%s810 + $0x78] sm:$0xff]
  %vm827 = vcmp.ge.s32.totalorder %v174, 4
  %vm828 = vcmp.ge.s32.totalorder %v175, 4
  %vm829 = vcmp.ge.s32.totalorder %v176, 4
  %vm830 = vcmp.ge.s32.totalorder %v177, 4
  %v831 = vrot.slane %v792, 4
  %v832 = vrot.slane %v797, 4
  %v833 = vrot.slane %v802, 4
  %v834 = vrot.slane %v807, 4
  %vm835 = vcmp.lt.s32.totalorder %v126, 4
  %v836 = vsel %vm835, %v833, %v834
  %v837 = vsel %vm835, %v832, %v833
  %v838 = vsel %vm835, %v831, %v832
  %v839 = vsel %vm835, %v834, %v831
  %v840 = vsel %vm827, 1, 0
  %v841 = vsel %vm828, 1, 0
  %v842 = vsel %vm829, 1, 0
  %v843 = vsel %vm830, 1, 0
  %vm844 = vcmp.eq.s32.totalorder %v840, 1
  %vm845 = vcmp.eq.s32.totalorder %v841, 1
  %vm846 = vcmp.eq.s32.totalorder %v842, 1
  %vm847 = vcmp.eq.s32.totalorder %v843, 1
  %v848 = vsel %vm844, %v839, 0.0
  %v849 = vsel %vm845, %v838, 0.0
  %v850 = vsel %vm846, %v837, 0.0
  %v851 = vsel %vm847, %v836, 0.0
  %vm852 = vcmp.lt.s32.totalorder %v174, 12
  %vm853 = vcmp.lt.s32.totalorder %v175, 12
  %vm854 = vcmp.lt.s32.totalorder %v176, 12
  %vm855 = vcmp.lt.s32.totalorder %v177, 12
  %v856 = vsel %vm852, 1, 0
  %v857 = vsel %vm853, 1, 0
  %v858 = vsel %vm854, 1, 0
  %v859 = vsel %vm855, 1, 0
  %vm860 = vcmp.eq.s32.totalorder %v856, 1
  %vm861 = vcmp.eq.s32.totalorder %v857, 1
  %vm862 = vcmp.eq.s32.totalorder %v858, 1
  %vm863 = vcmp.eq.s32.totalorder %v859, 1
  %v864 = vsel %vm860, %v838, 0.0
  %v865 = vsel %vm861, %v837, 0.0
  %v866 = vsel %vm862, %v836, 0.0
  %v867 = vsel %vm863, %v839, 0.0
  %872 = vrot.lane.b32.xlu0 %v792, 32
  %v873 = vpop.permute.xlu0 %872
  %874 = vrot.lane.b32.xlu0 %v797, 32
  %v875 = vpop.permute.xlu0 %874
  %876 = vrot.lane.b32.xlu0 %v802, 32
  %v877 = vpop.permute.xlu0 %876
  %878 = vrot.lane.b32.xlu0 %v807, 32
  %v879 = vpop.permute.xlu0 %878
  %888 = vrot.lane.b32.xlu0 %v864, 64
  %v889 = vpop.permute.xlu0 %888
  %890 = vrot.lane.b32.xlu0 %v865, 64
  %v891 = vpop.permute.xlu0 %890
  %892 = vrot.lane.b32.xlu0 %v866, 64
  %v893 = vpop.permute.xlu0 %892
  %894 = vrot.lane.b32.xlu0 %v867, 64
  %v895 = vpop.permute.xlu0 %894
  %v900 = vsel %vm276, %v848, %v873
  %v901 = vsel %vm276, %v849, %v875
  %v902 = vsel %vm276, %v850, %v877
  %v903 = vsel %vm276, %v851, %v879
  %v904 = vsel %vm281, %v900, %v889
  %v905 = vsel %vm281, %v901, %v891
  %v906 = vsel %vm281, %v902, %v893
  %v907 = vsel %vm281, %v903, %v895
  %v908 = vld [vmem:[%s2 + $0x3] sm:$0x1]
  %v909 = vlaneseq
  %v910 = vshrl.u32 %v909, 7
  %v911 = vsub.s32 0, %v910
  %v912 = vrot.slane %v908, %v911
  %v914 = vsel %vm291, %v904, 0
  %v917 = vsel %vm291, %v905, 0
  %v920 = vsel %vm291, %v906, 0
  %v923 = vsel %vm291, %v907, 0
  %925 = vmatprep.subr.mxu0 0.0
  %926 = vmatpush1.msra.mxu0 %v811
  %927 = vmatprep.subr.mxu0 0.0
  %928 = vmatpush1.msra.mxu0 %v812
  %929 = vmatprep.subr.mxu0 0.0
  %930 = vmatpush1.msra.mxu0 %v813
  %931 = vmatprep.subr.mxu0 0.0
  %932 = vmatpush1.msra.mxu0 %v814
  %933 = vmatprep.subr.mxu0 0.0
  %934 = vmatpush1.msra.mxu0 %v815
  %935 = vmatprep.subr.mxu0 0.0
  %936 = vmatpush1.msra.mxu0 %v816
  %937 = vmatprep.subr.mxu0 0.0
  %938 = vmatpush1.msra.mxu0 %v817
  %939 = vmatprep.subr.mxu0 0.0
  %940 = vmatpush1.msra.mxu0 %v818
  %941 = vmatprep.subr.mxu0 0.0
  %942 = vmatpush1.msra.mxu0 %v819
  %943 = vmatprep.subr.mxu0 0.0
  %944 = vmatpush1.msra.mxu0 %v820
  %945 = vmatprep.subr.mxu0 0.0
  %946 = vmatpush1.msra.mxu0 %v821
  %947 = vmatprep.subr.mxu0 0.0
  %948 = vmatpush1.msra.mxu0 %v822
  %949 = vmatprep.subr.mxu0 0.0
  %950 = vmatpush1.msra.mxu0 0.0
  %951 = vmatprep.subr.mxu0 0.0
  %952 = vmatpush1.msra.mxu0 0.0
  %953 = vmatprep.subr.mxu0 0.0
  %954 = vmatpush1.msra.mxu0 0.0
  %955 = vmatprep.subr.mxu0 0.0
  %956 = vmatpush1.msra.mxu0 0.0
  %957 = vmatprep.subr.mxu0 0.0
  %958 = vmatpush1.msra.mxu0 0.0
  %959 = vmatprep.subr.mxu0 0.0
  %960 = vmatpush1.msra.mxu0 0.0
  %961 = vmatprep.subr.mxu0 0.0
  %962 = vmatpush1.msra.mxu0 0.0
  %963 = vmatprep.subr.mxu0 0.0
  %964 = vmatpush1.msra.mxu0 0.0
  %965 = vmatprep.subr.mxu0 0.0
  %966 = vmatpush1.msra.mxu0 0.0
  %967 = vmatprep.subr.mxu0 0.0
  %968 = vmatpush1.msra.mxu0 0.0
  %969 = vmatprep.subr.mxu0 0.0
  %970 = vmatpush1.msra.mxu0 0.0
  %971 = vmatprep.subr.mxu0 0.0
  %972 = vmatpush1.msra.mxu0 0.0
  %973 = vmatprep.subr.mxu0 0.0
  %974 = vmatpush1.msra.mxu0 0.0
  %975 = vmatprep.subr.mxu0 0.0
  %976 = vmatpush1.msra.mxu0 0.0
  %977 = vmatprep.subr.mxu0 0.0
  %978 = vmatpush1.msra.mxu0 0.0
  %979 = vmatprep.subr.mxu0 0.0
  %980 = vmatpush1.msra.mxu0 0.0
  %981 = vmatprep.subr.mxu0 0.0
  %982 = vmatpush1.msra.mxu0 0.0
  %983 = vmatprep.subr.mxu0 0.0
  %984 = vmatpush1.msra.mxu0 0.0
  %985 = vmatprep.subr.mxu0 0.0
  %986 = vmatpush1.msra.mxu0 0.0
  %987 = vmatprep.subr.mxu0 0.0
  %988 = vmatpush1.msra.mxu0 0.0
  %989 = vmatprep.mubr.f32.mxu0 0.0
  %990 = vmatmul.mubr.f32.gmra.mrb[0].mxu0 %v914
  %v991 = vpop.f32.mrb[0].mxu0
  %v992 = vadd.f32 %v912, %v991
  %v993 = vpop.f32.mrb[0].mxu0
  %994 = vmatprep.mubr.f32.mxu0 0.0
  %995 = vmatmul.mubr.f32.gmra.mrb[0].mxu0 %v917
  %v996 = vpop.f32.mrb[0].mxu0
  %v997 = vadd.f32 %v912, %v996
  %v998 = vpop.f32.mrb[0].mxu0
  %999 = vmatprep.mubr.f32.mxu0 0.0
  %1000 = vmatmul.mubr.f32.gmra.mrb[0].mxu0 %v920
  %v1001 = vpop.f32.mrb[0].mxu0
  %v1002 = vadd.f32 %v912, %v1001
  %v1003 = vpop.f32.mrb[0].mxu0
  %1004 = vmatprep.mubr.f32.mxu0 0.0
  %1005 = vmatmul.mubr.f32.gmra.mrb[0].mxu0 %v923
  %v1006 = vpop.f32.mrb[0].mxu0
  %v1007 = vadd.f32 %v912, %v1006
  %v1008 = vpop.f32.mrb[0].mxu0
  %1009 = vdwg.mxu0
  %v1010 = vmax.f32 %v992, 0.0
  %v1011 = vmax.f32 %v997, 0.0
  %v1012 = vmax.f32 %v1002, 0.0
  %v1013 = vmax.f32 %v1007, 0.0
  %v1014 = vld [vmem:[%s2 + $0x6] sm:$0x1]
  %v1015 = vlaneseq
  %v1016 = vshrl.u32 %v1015, 7
  %v1017 = vsub.s32 0, %v1016
  %v1018 = vrot.slane %v1014, %v1017
  %v1020 = vsel %vm276, %v1010, 0
  %v1023 = vsel %vm276, %v1011, 0
  %v1026 = vsel %vm276, %v1012, 0
  %v1029 = vsel %vm276, %v1013, 0
  %1031 = vmatprep.subr.mxu0 0.0
  %1032 = vmatpush1.msra.mxu0 %v823
  %1033 = vmatprep.subr.mxu0 0.0
  %1034 = vmatpush1.msra.mxu0 %v824
  %1035 = vmatprep.subr.mxu0 0.0
  %1036 = vmatpush1.msra.mxu0 %v825
  %1037 = vmatprep.subr.mxu0 0.0
  %1038 = vmatpush1.msra.mxu0 %v826
  %1039 = vmatprep.subr.mxu0 0.0
  %1040 = vmatpush1.msra.mxu0 0.0
  %1041 = vmatprep.subr.mxu0 0.0
  %1042 = vmatpush1.msra.mxu0 0.0
  %1043 = vmatprep.subr.mxu0 0.0
  %1044 = vmatpush1.msra.mxu0 0.0
  %1045 = vmatprep.subr.mxu0 0.0
  %1046 = vmatpush1.msra.mxu0 0.0
  %1047 = vmatprep.subr.mxu0 0.0
  %1048 = vmatpush1.msra.mxu0 0.0
  %1049 = vmatprep.subr.mxu0 0.0
  %1050 = vmatpush1.msra.mxu0 0.0
  %1051 = vmatprep.subr.mxu0 0.0
  %1052 = vmatpush1.msra.mxu0 0.0
  %1053 = vmatprep.subr.mxu0 0.0
  %1054 = vmatpush1.msra.mxu0 0.0
  %1055 = vmatprep.subr.mxu0 0.0
  %1056 = vmatpush1.msra.mxu0 0.0
  %1057 = vmatprep.subr.mxu0 0.0
  %1058 = vmatpush1.msra.mxu0 0.0
  %1059 = vmatprep.subr.mxu0 0.0
  %1060 = vmatpush1.msra.mxu0 0.0
  %1061 = vmatprep.subr.mxu0 0.0
  %1062 = vmatpush1.msra.mxu0 0.0
  %1063 = vmatprep.subr.mxu0 0.0
  %1064 = vmatpush1.msra.mxu0 0.0
  %1065 = vmatprep.subr.mxu0 0.0
  %1066 = vmatpush1.msra.mxu0 0.0
  %1067 = vmatprep.subr.mxu0 0.0
  %1068 = vmatpush1.msra.mxu0 0.0
  %1069 = vmatprep.subr.mxu0 0.0
  %1070 = vmatpush1.msra.mxu0 0.0
  %1071 = vmatprep.subr.mxu0 0.0
  %1072 = vmatpush1.msra.mxu0 0.0
  %1073 = vmatprep.subr.mxu0 0.0
  %1074 = vmatpush1.msra.mxu0 0.0
  %1075 = vmatprep.subr.mxu0 0.0
  %1076 = vmatpush1.msra.mxu0 0.0
  %1077 = vmatprep.subr.mxu0 0.0
  %1078 = vmatpush1.msra.mxu0 0.0
  %1079 = vmatprep.subr.mxu0 0.0
  %1080 = vmatpush1.msra.mxu0 0.0
  %1081 = vmatprep.subr.mxu0 0.0
  %1082 = vmatpush1.msra.mxu0 0.0
  %1083 = vmatprep.subr.mxu0 0.0
  %1084 = vmatpush1.msra.mxu0 0.0
  %1085 = vmatprep.subr.mxu0 0.0
  %1086 = vmatpush1.msra.mxu0 0.0
  %1087 = vmatprep.subr.mxu0 0.0
  %1088 = vmatpush1.msra.mxu0 0.0
  %1089 = vmatprep.subr.mxu0 0.0
  %1090 = vmatpush1.msra.mxu0 0.0
  %1091 = vmatprep.subr.mxu0 0.0
  %1092 = vmatpush1.msra.mxu0 0.0
  %1093 = vmatprep.subr.mxu0 0.0
  %1094 = vmatpush1.msra.mxu0 0.0
  %1095 = vmatprep.mubr.f32.mxu0 0.0
  %1096 = vmatmul.mubr.f32.gmra.mrb[0].mxu0 %v1020
  %v1097 = vpop.f32.mrb[0].mxu0
  %v1098 = vadd.f32 %v1018, %v1097
  %v1099 = vpop.f32.mrb[0].mxu0
  %1100 = vmatprep.mubr.f32.mxu0 0.0
  %1101 = vmatmul.mubr.f32.gmra.mrb[0].mxu0 %v1023
  %v1102 = vpop.f32.mrb[0].mxu0
  %v1103 = vadd.f32 %v1018, %v1102
  %v1104 = vpop.f32.mrb[0].mxu0
  %1105 = vmatprep.mubr.f32.mxu0 0.0
  %1106 = vmatmul.mubr.f32.gmra.mrb[0].mxu0 %v1026
  %v1107 = vpop.f32.mrb[0].mxu0
  %v1108 = vadd.f32 %v1018, %v1107
  %v1109 = vpop.f32.mrb[0].mxu0
  %1110 = vmatprep.mubr.f32.mxu0 0.0
  %1111 = vmatmul.mubr.f32.gmra.mrb[0].mxu0 %v1029
  %v1112 = vpop.f32.mrb[0].mxu0
  %v1113 = vadd.f32 %v1018, %v1112
  %v1114 = vpop.f32.mrb[0].mxu0
  %1115 = vdwg.mxu0
  %1116 = vst.msk [vmem:[#allocation2] sm:$0xff] %vm276, %v1098
  %1117 = vst.msk [vmem:[#allocation2 + $0x8] sm:$0xff] %vm276, %v1103
  %1118 = vst.msk [vmem:[#allocation2 + $0x10] sm:$0xff] %vm276, %v1108
  %1119 = vst.msk [vmem:[#allocation2 + $0x18] sm:$0xff] %vm276, %v1113
  %s1120 = scalar_lea.vmem [#allocation2], 15
  %v1121 = vld [vmem:[%s1120] ss:$16 sm:$0x3]
  %s1122 = scalar_lea.vmem %s3, 384
  %v1123 = vld [vmem:[%s1122] sm:$0xff]
  %v1124 = vld [vmem:[%s1122 + $0x8] sm:$0xff]
  %v1125 = vld [vmem:[%s1122 + $0x10] sm:$0xff]
  %v1126 = vld [vmem:[%s1122 + $0x18] sm:$0xff]
  %v1127 = vld [vmem:[%s2 + $0x7] sm:$0x1]
  %v1128 = vlaneseq
  %v1129 = vshrl.u32 %v1128, 7
  %v1130 = vsub.s32 0, %v1129
  %v1131 = vrot.slane %v1127, %v1130
  %v1133 = vsel %vm276, %v1121, 0
  %1135 = vmatprep.subr.mxu0 0.0
  %1136 = vmatpush1.msra.mxu0 %v1123
  %1137 = vmatprep.subr.mxu0 0.0
  %1138 = vmatpush1.msra.mxu0 %v1124
  %1139 = vmatprep.subr.mxu0 0.0
  %1140 = vmatpush1.msra.mxu0 %v1125
  %1141 = vmatprep.subr.mxu0 0.0
  %1142 = vmatpush1.msra.mxu0 %v1126
  %1143 = vmatprep.subr.mxu0 0.0
  %1144 = vmatpush1.msra.mxu0 0.0
  %1145 = vmatprep.subr.mxu0 0.0
  %1146 = vmatpush1.msra.mxu0 0.0
  %1147 = vmatprep.subr.mxu0 0.0
  %1148 = vmatpush1.msra.mxu0 0.0
  %1149 = vmatprep.subr.mxu0 0.0
  %1150 = vmatpush1.msra.mxu0 0.0
  %1151 = vmatprep.subr.mxu0 0.0
  %1152 = vmatpush1.msra.mxu0 0.0
  %1153 = vmatprep.subr.mxu0 0.0
  %1154 = vmatpush1.msra.mxu0 0.0
  %1155 = vmatprep.subr.mxu0 0.0
  %1156 = vmatpush1.msra.mxu0 0.0
  %1157 = vmatprep.subr.mxu0 0.0
  %1158 = vmatpush1.msra.mxu0 0.0
  %1159 = vmatprep.subr.mxu0 0.0
  %1160 = vmatpush1.msra.mxu0 0.0
  %1161 = vmatprep.subr.mxu0 0.0
  %1162 = vmatpush1.msra.mxu0 0.0
  %1163 = vmatprep.subr.mxu0 0.0
  %1164 = vmatpush1.msra.mxu0 0.0
  %1165 = vmatprep.subr.mxu0 0.0
  %1166 = vmatpush1.msra.mxu0 0.0
  %1167 = vmatprep.subr.mxu0 0.0
  %1168 = vmatpush1.msra.mxu0 0.0
  %1169 = vmatprep.subr.mxu0 0.0
  %1170 = vmatpush1.msra.mxu0 0.0
  %1171 = vmatprep.subr.mxu0 0.0
  %1172 = vmatpush1.msra.mxu0 0.0
  %1173 = vmatprep.subr.mxu0 0.0
  %1174 = vmatpush1.msra.mxu0 0.0
  %1175 = vmatprep.subr.mxu0 0.0
  %1176 = vmatpush1.msra.mxu0 0.0
  %1177 = vmatprep.subr.mxu0 0.0
  %1178 = vmatpush1.msra.mxu0 0.0
  %1179 = vmatprep.subr.mxu0 0.0
  %1180 = vmatpush1.msra.mxu0 0.0
  %1181 = vmatprep.subr.mxu0 0.0
  %1182 = vmatpush1.msra.mxu0 0.0
  %1183 = vmatprep.subr.mxu0 0.0
  %1184 = vmatpush1.msra.mxu0 0.0
  %1185 = vmatprep.subr.mxu0 0.0
  %1186 = vmatpush1.msra.mxu0 0.0
  %1187 = vmatprep.subr.mxu0 0.0
  %1188 = vmatpush1.msra.mxu0 0.0
  %1189 = vmatprep.subr.mxu0 0.0
  %1190 = vmatpush1.msra.mxu0 0.0
  %1191 = vmatprep.subr.mxu0 0.0
  %1192 = vmatpush1.msra.mxu0 0.0
  %1193 = vmatprep.subr.mxu0 0.0
  %1194 = vmatpush1.msra.mxu0 0.0
  %1195 = vmatprep.subr.mxu0 0.0
  %1196 = vmatpush1.msra.mxu0 0.0
  %1197 = vmatprep.subr.mxu0 0.0
  %1198 = vmatpush1.msra.mxu0 0.0
  %1199 = vmatprep.mubr.f32.mxu0 0.0
  %1200 = vmatmul.mubr.f32.gmra.mrb[0].mxu0 %v1133
  %v1201 = vpop.f32.mrb[0].mxu0
  %v1202 = vadd.f32 %v1131, %v1201
  %v1203 = vpop.f32.mrb[0].mxu0
  %1204 = vdwg.mxu0
  %v1205 = vld [vmem:[%s2 + $0x8] sm:$0x1]
  %v1206 = vld [vmem:[%s2 + $0x9] sm:$0x1]
  %v1207 = vlaneseq
  %v1208 = vshrl.u32 %v1207, 7
  %v1209 = vsub.s32 0, %v1208
  %v1210 = vrot.slane %v1205, %v1209
  %v1211 = vmul.f32 %v1202, %v1210
  %vm1212 = vcmask 254976
  %v1213 = vsel %vm1212, %v1211, 0.0
  %1214 = vadd.xlane.f32.xlu0 %v1213
  %v1215 = vpop.xlane.xlu0 %1214
  %v1216 = vlaneseq
  %v1217 = vshrl.u32 %v1216, 7
  %v1218 = vsub.s32 0, %v1217
  %v1219 = vrot.slane %v1206, %v1218
  %v1220 = vadd.f32 %v1215, %v1219
  %vm1221 = vcmask 1024
  %1222 = vst.msk [vmem:[%s4] sm:$0x3] %vm1221, %v1220
  // Predicated region
  $region18: #{tpu_custom_call.1} parent=0 // pred_check
    _
  $region19: #{tpu_custom_call.1} parent=0 // pred_check_branch
    %1224 = sbr.rel (0) target = $region21
  $region20: #{tpu_custom_call.1} parent=0 // pred_region
    _
  $region21: #{tpu_custom_call.1} parent=0 // pred_fallthru
    _
  // Predicated region
  $region22: #{tpu_custom_call.1} parent=0 // pred_check
    _
  $region23: #{tpu_custom_call.1} parent=0 // pred_check_branch
    %1226 = sbr.rel (0) target = $region25
  $region24: #{tpu_custom_call.1} parent=0 // pred_region
    _
  $region25: #{tpu_custom_call.1} parent=0 // pred_fallthru
    _

</llo_original>
